<compile_context>
chip_gen: v7x
topology: tpu7x:2x2x1
jax: 0.10.0
libtpu: 0.0.40
codegen_flags: <defaults>
</compile_context>

<pallas_src>
import functools
import math
from typing import NamedTuple

import jax
import jax.numpy as jnp
from jax.experimental import pallas as pl
from jax.experimental.pallas import tpu as pltpu


def _round_up(x, m):
    return ((x + m - 1) // m) * m


# ----------------------------------------------------------------------------- kernel
def _ffn_kernel(x_ref, w1_ref, b1_ref, w2_ref, b2_ref, o_ref, acc_ref):
    # x_ref : (tm, Dp)   activation tile (compute dtype)
    # w1_ref: (Dp, Hc)   first-linear weight chunk
    # b1_ref: (1, Hc)    first bias chunk (f32)
    # w2_ref: (Hc, Dp)   second-linear weight chunk
    # b2_ref: (1, Dp)    second bias (f32)
    # o_ref : (tm, Dp)   output tile (x dtype)
    # acc_ref: (tm, Dp)  f32 accumulator scratch (persists across hidden chunks)
    k = pl.program_id(1)

    @pl.when(k == 0)
    def _init():
        acc_ref[...] = jnp.zeros_like(acc_ref)

    # First GEMM (f32 accumulation) + bias + GELU for this hidden chunk.
    h = jnp.dot(x_ref[...], w1_ref[...], preferred_element_type=jnp.float32)
    h = h + b1_ref[...]
    # tanh-approximate GELU (EUP tanh).
    # TODO(synk): PyTorch nn.GELU() defaults to the exact erf form; the tanh
    # approximation differs by <~3e-4 elementwise.
    h = jax.nn.gelu(h, approximate=True)

    # Second GEMM: accumulate this hidden chunk's contribution in f32.
    acc_ref[...] += jnp.dot(h.astype(w2_ref.dtype), w2_ref[...],
                            preferred_element_type=jnp.float32)

    @pl.when(k == pl.num_programs(1) - 1)
    def _finalize():
        o_ref[...] = (acc_ref[...] + b2_ref[...]).astype(o_ref.dtype)


# ----------------------------------------------------------------------------- params
class FFNParams(NamedTuple):
    w1p: jax.Array  # (Dp, Hp) compute dtype, pre-transposed + zero-padded
    b1p: jax.Array  # (1, Hp)  float32
    w2p: jax.Array  # (Hp, Dp) compute dtype, pre-transposed + zero-padded
    b2p: jax.Array  # (1, Dp)  float32
    dim: int
    hidden: int


def prepare_ffn_params(w1, b1, w2, b2, *, compute_dtype=None):
    """Hoisted per-layer weight prep: transpose, pad to 128-lane multiples, cast.

    torch nn.Linear layout: w1: (hidden, dim), b1: (hidden,), w2: (dim, hidden),
    b2: (dim,).  Zero padding is numerically exact (pad bias 0 -> GELU(0)=0).
    """
    hidden, dim = w1.shape
    assert w2.shape == (dim, hidden) and b1.shape == (hidden,) and b2.shape == (dim,)
    if compute_dtype is None:
        # bf16-native MXU on v5e/v6e/v7x; accumulation stays f32 in the kernel.
        compute_dtype = jnp.bfloat16 if w1.dtype == jnp.float32 else w1.dtype
    dp = _round_up(dim, 128)
    hp = _round_up(hidden, 128)

    def pad2(a, r, c):
        pr, pc = r - a.shape[0], c - a.shape[1]
        return a if (pr == 0 and pc == 0) else jnp.pad(a, ((0, pr), (0, pc)))

    w1p = pad2(w1.T.astype(compute_dtype), dp, hp)
    w2p = pad2(w2.T.astype(compute_dtype), hp, dp)
    b1p = pad2(b1.astype(jnp.float32).reshape(1, hidden), 1, hp)
    b2p = pad2(b2.astype(jnp.float32).reshape(1, dim), 1, dp)
    return FFNParams(w1p, b1p, w2p, b2p, dim, hidden)


# ----------------------------------------------------------------------------- config
@functools.lru_cache(maxsize=1)
def _vmem_limit_bytes():
    """~75% of physical per-core VMEM (v7x ~48 MiB, v5e/v6e ~96 MiB)."""
    try:
        cap = getattr(pltpu.get_tpu_info(), "vmem_capacity_bytes", None)
        if cap:
            return int(cap) * 3 // 4
    except Exception:
        pass
    return 64 * 1024 * 1024  # conservative fallback (accepted on all generations)


def _choose_tiles(m, dp, hp, in_bytes, out_bytes, tm_req, hidden_tile, budget,
                  single_buffer):
    """Pick (tm, hidden_chunk) so the working set fits the VMEM budget."""
    # M tile: multiple of 16; ensure >= 2 grid steps so both v7x TensorCores work.
    tm = max(16, min(_round_up(tm_req, 16), _round_up(m, 16)))
    if tm >= 32 and pl.cdiv(m, tm) < 2:
        tm = _round_up(pl.cdiv(m, 2), 16)

    def vmem_est(tm_, th_, n_k_):
        w_bufs = 1 if (single_buffer and n_k_ == 1) else 2
        return (2 * tm_ * dp * (in_bytes + out_bytes)   # double-buffered x / out tiles
                + tm_ * dp * 4                          # f32 accumulator scratch
                + w_bufs * 2 * dp * th_ * in_bytes      # W1 + W2 chunk buffers
                + w_bufs * th_ * 4 + dp * 4             # biases
                + tm_ * th_ * (4 + in_bytes))           # h (f32) + pre-GEMM cast copy

    def pick_th(tm_):
        if hidden_tile is not None:
            th_ = min(_round_up(hidden_tile, 128), hp)
            return th_ if hp % th_ == 0 else 128
        if vmem_est(tm_, hp, 1) <= budget:
            return hp                                   # weights fully resident
        for c in (2048, 1024, 512, 256, 128):
            if c < hp and hp % c == 0 and vmem_est(tm_, c, hp // c) <= budget:
                return c
        return 128

    while True:
        th = pick_th(tm)
        if vmem_est(tm, th, pl.cdiv(hp, th)) <= budget or tm <= 64:
            break
        tm = max(64, _round_up(tm // 2, 16))
    return tm, th


# ----------------------------------------------------------------------------- call
_SINGLE_BUFFER_WEIGHTS = True  # flipped off at runtime if pl.Buffered(1) is rejected


def _ffn_pallas_call(xp, params, tm, th, out_dtype, single_buffer):
    dp, hp = params.w1p.shape
    mp = xp.shape[0]
    n_k = hp // th

    def bs(shape, imap, mode=None):
        if mode is None:
            return pl.BlockSpec(shape, imap)
        return pl.BlockSpec(shape, imap, pipeline_mode=mode)

    const_mode = pl.Buffered(1) if single_buffer else None
    # Weight/bias-1 indices vary with k only when hidden is actually chunked.
    w_mode = const_mode if n_k == 1 else None

    in_specs = [
        bs((tm, dp), lambda i, k: (i, 0)),             # activation tile
        bs((dp, th), lambda i, k: (0, k), w_mode),     # W1 chunk
        bs((1, th), lambda i, k: (0, k), w_mode),      # b1 chunk (f32)
        bs((th, dp), lambda i, k: (k, 0), w_mode),     # W2 chunk
        bs((1, dp), lambda i, k: (0, 0), const_mode),  # b2 (constant index)
    ]

    in_bytes = params.w1p.dtype.itemsize
    out_bytes = jnp.dtype(out_dtype).itemsize
    cost = pl.CostEstimate(
        flops=4 * mp * dp * hp,                        # two GEMMs
        transcendentals=mp * hp,                       # tanh in GELU
        bytes_accessed=(mp * dp * (in_bytes + out_bytes)
                        + 2 * dp * hp * in_bytes + (hp + dp) * 4),
    )

    return pl.pallas_call(
        _ffn_kernel,
        out_shape=jax.ShapeDtypeStruct((mp, dp), out_dtype),
        grid_spec=pltpu.PrefetchScalarGridSpec(
            num_scalar_prefetch=0,
            grid=(mp // tm, n_k),                      # reduction (hidden) axis last
            in_specs=in_specs,
            out_specs=pl.BlockSpec((tm, dp), lambda i, k: (i, 0)),
            scratch_shapes=[pltpu.VMEM((tm, dp), jnp.float32)],
        ),
        compiler_params=pltpu.CompilerParams(
            dimension_semantics=("parallel", "arbitrary"),
            vmem_limit_bytes=int(_vmem_limit_bytes()),
        ),
        cost_estimate=cost,
    )(xp, params.w1p, params.b1p, params.w2p, params.b2p)


def feedforward_prepared(x, params, *, tm=None, hidden_tile=None):
    """Fused MLP on x using pre-prepared (transposed/padded/cast) parameters."""
    global _SINGLE_BUFFER_WEIGHTS
    orig_shape = x.shape
    dim, cdt = params.dim, params.w1p.dtype
    assert orig_shape[-1] == dim, (orig_shape, dim)
    dp, hp = params.w1p.shape

    m = math.prod(orig_shape[:-1])
    if tm is None:
        # Larger M-tiles amortize per-step overhead on 128-MiB-VMEM chips (v5e/v6e).
        tm = 512 if _vmem_limit_bytes() >= 72 * 1024 * 1024 else 256

    in_bytes = jnp.dtype(cdt).itemsize
    out_bytes = jnp.dtype(x.dtype).itemsize
    budget = int(_vmem_limit_bytes() * 0.8)
    tm_eff, th = _choose_tiles(m, dp, hp, in_bytes, out_bytes, tm, hidden_tile,
                               budget, _SINGLE_BUFFER_WEIGHTS)
    mp = _round_up(m, tm_eff)

    xf = x.reshape(m, dim).astype(cdt)
    if mp != m or dp != dim:
        xf = jnp.pad(xf, ((0, mp - m), (0, dp - dim)))   # only when actually needed

    def run(single_buffer):
        return _ffn_pallas_call(xf, params, tm_eff, th, x.dtype, single_buffer)

    try:
        out_padded = run(_SINGLE_BUFFER_WEIGHTS)
    except Exception:
        if not _SINGLE_BUFFER_WEIGHTS:
            raise
        _SINGLE_BUFFER_WEIGHTS = False   # runtime rejected Buffered(1): fall back
        out_padded = run(False)

    if mp != m or dp != dim:
        out_padded = out_padded[:m, :dim]
    return out_padded.reshape(orig_shape)


def feedforward(x, w1, b1, w2, b2, *, compute_dtype=None, tm=None, hidden_tile=None):
    """One-shot convenience wrapper (re-prepares weights every call).  For
    repeated per-layer use, call prepare_ffn_params() once and feedforward_prepared()."""
    params = prepare_ffn_params(w1, b1, w2, b2, compute_dtype=compute_dtype)
    return feedforward_prepared(x, params, tm=tm, hidden_tile=hidden_tile)


# ----------------------------------------------------------------------------- reference
def _reference(x, w1, b1, w2, b2, compute_dtype=jnp.float32):
    """Pure-JAX reference mirroring the PyTorch forward (tanh-approx GELU),
    evaluated at the kernel's compute dtype with f32 accumulation."""
    cdt = compute_dtype
    h = jnp.dot(x.astype(cdt), w1.T.astype(cdt),
                preferred_element_type=jnp.float32) + b1.astype(jnp.float32)
    h = jax.nn.gelu(h, approximate=True)
    out = jnp.dot(h.astype(cdt), w2.T.astype(cdt),
                  preferred_element_type=jnp.float32) + b2.astype(jnp.float32)
    return out.astype(x.dtype)


if __name__ == "__main__":
    key = jax.random.PRNGKey(0)

    def make_linear_params(k, dim, hidden):
        k1, k2, k3, k4 = jax.random.split(k, 4)
        bound1 = 1.0 / dim ** 0.5
        w1 = jax.random.uniform(k1, (hidden, dim), jnp.float32, -bound1, bound1)
        b1 = jax.random.uniform(k2, (hidden,), jnp.float32, -bound1, bound1)
        bound2 = 1.0 / hidden ** 0.5
        w2 = jax.random.uniform(k3, (dim, hidden), jnp.float32, -bound2, bound2)
        b2 = jax.random.uniform(k4, (dim,), jnp.float32, -bound2, bound2)
        return w1, b1, w2, b2

    kx1, kp1, kx2, kp2 = jax.random.split(key, 4)

    # Case 1: dim multiple of 128 (no feature pad), f32 compute, resident weights.
    B, SEQ, DIM, HIDDEN = 2, 64, 128, 512
    x = jax.random.normal(kx1, (B, SEQ, DIM), jnp.float32)
    w1, b1, w2, b2 = make_linear_params(kp1, DIM, HIDDEN)
    params_f32 = prepare_ffn_params(w1, b1, w2, b2, compute_dtype=jnp.float32)
    out = jax.block_until_ready(feedforward_prepared(x, params_f32))
    ref = _reference(x, w1, b1, w2, b2, jnp.float32)
    assert out.shape == (B, SEQ, DIM)
    err = float(jnp.max(jnp.abs(out - ref)))
    assert jnp.allclose(out, ref, atol=2e-2, rtol=2e-2), err

    # Case 2: dim needing lane padding, forced hidden chunking (k accumulation
    # path), default bf16 compute (f32 accumulation).
    B2, SEQ2, DIM2, HIDDEN2 = 2, 32, 64, 256
    x2 = jax.random.normal(kx2, (B2, SEQ2, DIM2), jnp.float32)
    w1b, b1b, w2b, b2b = make_linear_params(kp2, DIM2, HIDDEN2)
    params_bf16 = prepare_ffn_params(w1b, b1b, w2b, b2b)   # defaults to bf16 compute
    out2 = jax.block_until_ready(
        feedforward_prepared(x2, params_bf16, hidden_tile=128))
    ref2 = _reference(x2, w1b, b1b, w2b, b2b, jnp.bfloat16)
    assert out2.shape == (B2, SEQ2, DIM2)
    err2 = float(jnp.max(jnp.abs(out2 - ref2)))
    assert jnp.allclose(out2, ref2, atol=3e-2, rtol=3e-2), err2

    print("KERNEL_OK")
</pallas_src>

<mosaic_0001>
module attributes {stable_mosaic.version = 11 : i64} {
  func.func @_ffn_kernel(%arg0: i32, %arg1: i32, %arg2: memref<64x128xf32, #tpu.memory_space<vmem>>, %arg3: memref<128x512xf32, #tpu.memory_space<vmem>>, %arg4: memref<1x512xf32, #tpu.memory_space<vmem>>, %arg5: memref<512x128xf32, #tpu.memory_space<vmem>>, %arg6: memref<1x128xf32, #tpu.memory_space<vmem>>, %arg7: memref<64x128xf32, #tpu.memory_space<vmem>>, %arg8: memref<64x128xf32, #tpu.memory_space<vmem>>) attributes {dimension_semantics = [#tpu.dimension_semantics<parallel>, #tpu.dimension_semantics<arbitrary>], iteration_bounds = array<i64: 2, 1>, scalar_prefetch = 0 : i64, scratch_operands = 1 : i64, tpu.core_type = #tpu.core_type<tc>, window_params = [{transform_indices = @transform_0, window_bounds = array<i64: 64, 128>}, {pipeline_mode = #tpu.pipeline_mode<synchronous>, transform_indices = @transform_1, window_bounds = array<i64: 128, 512>}, {pipeline_mode = #tpu.pipeline_mode<synchronous>, transform_indices = @transform_2, window_bounds = array<i64: 1, 512>}, {pipeline_mode = #tpu.pipeline_mode<synchronous>, transform_indices = @transform_3, window_bounds = array<i64: 512, 128>}, {pipeline_mode = #tpu.pipeline_mode<synchronous>, transform_indices = @transform_4, window_bounds = array<i64: 1, 128>}, {transform_indices = @transform_5, window_bounds = array<i64: 64, 128>}]} {
    %c0_i32 = arith.constant 0 : i32
    %0 = arith.cmpi eq, %arg1, %c0_i32 : i32
    %1 = arith.extui %0 : i1 to i32
    %c0_i32_0 = arith.constant 0 : i32
    %2 = arith.cmpi ne, %1, %c0_i32_0 : i32
    scf.if %2 {
      %cst_19 = arith.constant 0.000000e+00 : f32
      %30 = vector.broadcast %cst_19 : f32 to vector<64x128xf32>
      %c0_20 = arith.constant 0 : index
      %c0_21 = arith.constant 0 : index
      %31 = vector.load %arg8[%c0_20, %c0_21] : memref<64x128xf32, #tpu.memory_space<vmem>>, vector<64x128xf32>
      tpu.vector_store %arg8[%c0_20, %c0_21], %30 {strides = array<i32>} : memref<64x128xf32, #tpu.memory_space<vmem>>, vector<64x128xf32>,
    } else {
    }
    %c0 = arith.constant 0 : index
    %c0_1 = arith.constant 0 : index
    %3 = vector.load %arg2[%c0, %c0_1] : memref<64x128xf32, #tpu.memory_space<vmem>>, vector<64x128xf32>
    %c0_2 = arith.constant 0 : index
    %c0_3 = arith.constant 0 : index
    %4 = vector.load %arg3[%c0_2, %c0_3] : memref<128x512xf32, #tpu.memory_space<vmem>>, vector<128x512xf32>
    %cst = arith.constant dense<0.000000e+00> : vector<64x512xf32>
    %5 = tpu.matmul %3, %4, %cst {dimension_numbers = #tpu.dot_dimension_numbers<[1], [0], [0], [1], [0, 0, 1, 1], [], []>} : vector<64x128xf32>, vector<128x512xf32>, vector<64x512xf32> -> vector<64x512xf32>
    %c0_4 = arith.constant 0 : index
    %c0_5 = arith.constant 0 : index
    %6 = vector.load %arg4[%c0_4, %c0_5] : memref<1x512xf32, #tpu.memory_space<vmem>>, vector<1x512xf32>
    %7 = vector.broadcast %6 : vector<1x512xf32> to vector<64x512xf32>
    %8 = arith.addf %5, %7 : vector<64x512xf32>
    %9 = arith.mulf %8, %8 : vector<64x512xf32>
    %10 = arith.mulf %8, %9 : vector<64x512xf32>
    %cst_6 = arith.constant 4.471500e-02 : f32
    %11 = vector.broadcast %cst_6 : f32 to vector<64x512xf32>
    %12 = arith.mulf %11, %10 : vector<64x512xf32>
    %13 = arith.addf %8, %12 : vector<64x512xf32>
    %cst_7 = arith.constant 0.797884583 : f32
    %14 = vector.broadcast %cst_7 : f32 to vector<64x512xf32>
    %15 = arith.mulf %14, %13 : vector<64x512xf32>
    %16 = math.tanh %15 : vector<64x512xf32>
    %cst_8 = arith.constant 1.000000e+00 : f32
    %17 = vector.broadcast %cst_8 : f32 to vector<64x512xf32>
    %18 = arith.addf %17, %16 : vector<64x512xf32>
    %cst_9 = arith.constant 5.000000e-01 : f32
    %19 = vector.broadcast %cst_9 : f32 to vector<64x512xf32>
    %20 = arith.mulf %19, %18 : vector<64x512xf32>
    %21 = arith.mulf %8, %20 : vector<64x512xf32>
    %c0_10 = arith.constant 0 : index
    %c0_11 = arith.constant 0 : index
    %22 = vector.load %arg8[%c0_10, %c0_11] : memref<64x128xf32, #tpu.memory_space<vmem>>, vector<64x128xf32>
    %c0_12 = arith.constant 0 : index
    %c0_13 = arith.constant 0 : index
    %23 = vector.load %arg5[%c0_12, %c0_13] : memref<512x128xf32, #tpu.memory_space<vmem>>, vector<512x128xf32>
    %cst_14 = arith.constant dense<0.000000e+00> : vector<64x128xf32>
    %24 = tpu.matmul %21, %23, %cst_14 {dimension_numbers = #tpu.dot_dimension_numbers<[1], [0], [0], [1], [0, 0, 1, 1], [], []>} : vector<64x512xf32>, vector<512x128xf32>, vector<64x128xf32> -> vector<64x128xf32>
    %25 = arith.addf %22, %24 : vector<64x128xf32>
    %c0_15 = arith.constant 0 : index
    %c0_16 = arith.constant 0 : index
    %26 = vector.load %arg8[%c0_15, %c0_16] : memref<64x128xf32, #tpu.memory_space<vmem>>, vector<64x128xf32>
    tpu.vector_store %arg8[%c0_15, %c0_16], %25 {strides = array<i32>} : memref<64x128xf32, #tpu.memory_space<vmem>>, vector<64x128xf32>,
    %c0_i32_17 = arith.constant 0 : i32
    %27 = arith.cmpi eq, %arg1, %c0_i32_17 : i32
    %28 = arith.extui %27 : i1 to i32
    %c0_i32_18 = arith.constant 0 : i32
    %29 = arith.cmpi ne, %28, %c0_i32_18 : i32
    scf.if %29 {
      %c0_19 = arith.constant 0 : index
      %c0_20 = arith.constant 0 : index
      %30 = vector.load %arg8[%c0_19, %c0_20] : memref<64x128xf32, #tpu.memory_space<vmem>>, vector<64x128xf32>
      %c0_21 = arith.constant 0 : index
      %c0_22 = arith.constant 0 : index
      %31 = vector.load %arg6[%c0_21, %c0_22] : memref<1x128xf32, #tpu.memory_space<vmem>>, vector<1x128xf32>
      %32 = vector.broadcast %31 : vector<1x128xf32> to vector<64x128xf32>
      %33 = arith.addf %30, %32 : vector<64x128xf32>
      %c0_23 = arith.constant 0 : index
      %c0_24 = arith.constant 0 : index
      %34 = vector.load %arg7[%c0_23, %c0_24] : memref<64x128xf32, #tpu.memory_space<vmem>>, vector<64x128xf32>
      tpu.vector_store %arg7[%c0_23, %c0_24], %33 {strides = array<i32>} : memref<64x128xf32, #tpu.memory_space<vmem>>, vector<64x128xf32>,
    } else {
    }
    return
  }
  func.func @transform_0(%arg0: i32, %arg1: i32) -> (i32, i32) {
    %c0_i32 = arith.constant 0 : i32
    %c0_i32_0 = arith.constant 0 : i32
    return %arg0, %c0_i32 : i32, i32
  }
  func.func @transform_1(%arg0: i32, %arg1: i32) -> (i32, i32) {
    %c0_i32 = arith.constant 0 : i32
    %c0_i32_0 = arith.constant 0 : i32
    return %c0_i32, %arg1 : i32, i32
  }
  func.func @transform_2(%arg0: i32, %arg1: i32) -> (i32, i32) {
    %c0_i32 = arith.constant 0 : i32
    %c0_i32_0 = arith.constant 0 : i32
    return %c0_i32, %arg1 : i32, i32
  }
  func.func @transform_3(%arg0: i32, %arg1: i32) -> (i32, i32) {
    %c0_i32 = arith.constant 0 : i32
    %c0_i32_0 = arith.constant 0 : i32
    return %arg1, %c0_i32 : i32, i32
  }
  func.func @transform_4(%arg0: i32, %arg1: i32) -> (i32, i32) {
    %c0_i32 = arith.constant 0 : i32
    %c0_i32_0 = arith.constant 0 : i32
    %c0_i32_1 = arith.constant 0 : i32
    return %c0_i32, %c0_i32_0 : i32, i32
  }
  func.func @transform_5(%arg0: i32, %arg1: i32) -> (i32, i32) {
    %c0_i32 = arith.constant 0 : i32
    %c0_i32_0 = arith.constant 0 : i32
    return %arg0, %c0_i32 : i32, i32
  }
}

module attributes {stable_mosaic.version = 11 : i64} {
  func.func @_ffn_kernel(%arg0: i32, %arg1: i32, %arg2: memref<64x128xf32, #tpu.memory_space<vmem>>, %arg3: memref<128x512xf32, #tpu.memory_space<vmem>>, %arg4: memref<1x512xf32, #tpu.memory_space<vmem>>, %arg5: memref<512x128xf32, #tpu.memory_space<vmem>>, %arg6: memref<1x128xf32, #tpu.memory_space<vmem>>, %arg7: memref<64x128xf32, #tpu.memory_space<vmem>>, %arg8: memref<64x128xf32, #tpu.memory_space<vmem>>) attributes {dimension_semantics = [#tpu.dimension_semantics<parallel>, #tpu.dimension_semantics<arbitrary>], iteration_bounds = array<i64: 2, 1>, scalar_prefetch = 0 : i64, scratch_operands = 1 : i64, tpu.core_type = #tpu.core_type<tc>, window_params = [{transform_indices = @transform_0, window_bounds = array<i64: 64, 128>}, {transform_indices = @transform_1, window_bounds = array<i64: 128, 512>}, {transform_indices = @transform_2, window_bounds = array<i64: 1, 512>}, {transform_indices = @transform_3, window_bounds = array<i64: 512, 128>}, {pipeline_mode = #tpu.pipeline_mode<synchronous>, transform_indices = @transform_4, window_bounds = array<i64: 1, 128>}, {transform_indices = @transform_5, window_bounds = array<i64: 64, 128>}]} {
    %c0_i32 = arith.constant 0 : i32
    %0 = arith.cmpi eq, %arg1, %c0_i32 : i32
    %1 = arith.extui %0 : i1 to i32
    %c0_i32_0 = arith.constant 0 : i32
    %2 = arith.cmpi ne, %1, %c0_i32_0 : i32
    scf.if %2 {
      %cst_19 = arith.constant 0.000000e+00 : f32
      %30 = vector.broadcast %cst_19 : f32 to vector<64x128xf32>
      %c0_20 = arith.constant 0 : index
      %c0_21 = arith.constant 0 : index
      %31 = vector.load %arg8[%c0_20, %c0_21] : memref<64x128xf32, #tpu.memory_space<vmem>>, vector<64x128xf32>
      tpu.vector_store %arg8[%c0_20, %c0_21], %30 {strides = array<i32>} : memref<64x128xf32, #tpu.memory_space<vmem>>, vector<64x128xf32>,
    } else {
    }
    %c0 = arith.constant 0 : index
    %c0_1 = arith.constant 0 : index
    %3 = vector.load %arg2[%c0, %c0_1] : memref<64x128xf32, #tpu.memory_space<vmem>>, vector<64x128xf32>
    %c0_2 = arith.constant 0 : index
    %c0_3 = arith.constant 0 : index
    %4 = vector.load %arg3[%c0_2, %c0_3] : memref<128x512xf32, #tpu.memory_space<vmem>>, vector<128x512xf32>
    %cst = arith.constant dense<0.000000e+00> : vector<64x512xf32>
    %5 = tpu.matmul %3, %4, %cst {dimension_numbers = #tpu.dot_dimension_numbers<[1], [0], [0], [1], [0, 0, 1, 1], [], []>} : vector<64x128xf32>, vector<128x512xf32>, vector<64x512xf32> -> vector<64x512xf32>
    %c0_4 = arith.constant 0 : index
    %c0_5 = arith.constant 0 : index
    %6 = vector.load %arg4[%c0_4, %c0_5] : memref<1x512xf32, #tpu.memory_space<vmem>>, vector<1x512xf32>
    %7 = vector.broadcast %6 : vector<1x512xf32> to vector<64x512xf32>
    %8 = arith.addf %5, %7 : vector<64x512xf32>
    %9 = arith.mulf %8, %8 : vector<64x512xf32>
    %10 = arith.mulf %8, %9 : vector<64x512xf32>
    %cst_6 = arith.constant 4.471500e-02 : f32
    %11 = vector.broadcast %cst_6 : f32 to vector<64x512xf32>
    %12 = arith.mulf %11, %10 : vector<64x512xf32>
    %13 = arith.addf %8, %12 : vector<64x512xf32>
    %cst_7 = arith.constant 0.797884583 : f32
    %14 = vector.broadcast %cst_7 : f32 to vector<64x512xf32>
    %15 = arith.mulf %14, %13 : vector<64x512xf32>
    %16 = math.tanh %15 : vector<64x512xf32>
    %cst_8 = arith.constant 1.000000e+00 : f32
    %17 = vector.broadcast %cst_8 : f32 to vector<64x512xf32>
    %18 = arith.addf %17, %16 : vector<64x512xf32>
    %cst_9 = arith.constant 5.000000e-01 : f32
    %19 = vector.broadcast %cst_9 : f32 to vector<64x512xf32>
    %20 = arith.mulf %19, %18 : vector<64x512xf32>
    %21 = arith.mulf %8, %20 : vector<64x512xf32>
    %c0_10 = arith.constant 0 : index
    %c0_11 = arith.constant 0 : index
    %22 = vector.load %arg8[%c0_10, %c0_11] : memref<64x128xf32, #tpu.memory_space<vmem>>, vector<64x128xf32>
    %c0_12 = arith.constant 0 : index
    %c0_13 = arith.constant 0 : index
    %23 = vector.load %arg5[%c0_12, %c0_13] : memref<512x128xf32, #tpu.memory_space<vmem>>, vector<512x128xf32>
    %cst_14 = arith.constant dense<0.000000e+00> : vector<64x128xf32>
    %24 = tpu.matmul %21, %23, %cst_14 {dimension_numbers = #tpu.dot_dimension_numbers<[1], [0], [0], [1], [0, 0, 1, 1], [], []>} : vector<64x512xf32>, vector<512x128xf32>, vector<64x128xf32> -> vector<64x128xf32>
    %25 = arith.addf %22, %24 : vector<64x128xf32>
    %c0_15 = arith.constant 0 : index
    %c0_16 = arith.constant 0 : index
    %26 = vector.load %arg8[%c0_15, %c0_16] : memref<64x128xf32, #tpu.memory_space<vmem>>, vector<64x128xf32>
    tpu.vector_store %arg8[%c0_15, %c0_16], %25 {strides = array<i32>} : memref<64x128xf32, #tpu.memory_space<vmem>>, vector<64x128xf32>,
    %c0_i32_17 = arith.constant 0 : i32
    %27 = arith.cmpi eq, %arg1, %c0_i32_17 : i32
    %28 = arith.extui %27 : i1 to i32
    %c0_i32_18 = arith.constant 0 : i32
    %29 = arith.cmpi ne, %28, %c0_i32_18 : i32
    scf.if %29 {
      %c0_19 = arith.constant 0 : index
      %c0_20 = arith.constant 0 : index
      %30 = vector.load %arg8[%c0_19, %c0_20] : memref<64x128xf32, #tpu.memory_space<vmem>>, vector<64x128xf32>
      %c0_21 = arith.constant 0 : index
      %c0_22 = arith.constant 0 : index
      %31 = vector.load %arg6[%c0_21, %c0_22] : memref<1x128xf32, #tpu.memory_space<vmem>>, vector<1x128xf32>
      %32 = vector.broadcast %31 : vector<1x128xf32> to vector<64x128xf32>
      %33 = arith.addf %30, %32 : vector<64x128xf32>
      %c0_23 = arith.constant 0 : index
      %c0_24 = arith.constant 0 : index
      %34 = vector.load %arg7[%c0_23, %c0_24] : memref<64x128xf32, #tpu.memory_space<vmem>>, vector<64x128xf32>
      tpu.vector_store %arg7[%c0_23, %c0_24], %33 {strides = array<i32>} : memref<64x128xf32, #tpu.memory_space<vmem>>, vector<64x128xf32>,
    } else {
    }
    return
  }
  func.func @transform_0(%arg0: i32, %arg1: i32) -> (i32, i32) {
    %c0_i32 = arith.constant 0 : i32
    %c0_i32_0 = arith.constant 0 : i32
    return %arg0, %c0_i32 : i32, i32
  }
  func.func @transform_1(%arg0: i32, %arg1: i32) -> (i32, i32) {
    %c0_i32 = arith.constant 0 : i32
    %c0_i32_0 = arith.constant 0 : i32
    return %c0_i32, %arg1 : i32, i32
  }
  func.func @transform_2(%arg0: i32, %arg1: i32) -> (i32, i32) {
    %c0_i32 = arith.constant 0 : i32
    %c0_i32_0 = arith.constant 0 : i32
    return %c0_i32, %arg1 : i32, i32
  }
  func.func @transform_3(%arg0: i32, %arg1: i32) -> (i32, i32) {
    %c0_i32 = arith.constant 0 : i32
    %c0_i32_0 = arith.constant 0 : i32
    return %arg1, %c0_i32 : i32, i32
  }
  func.func @transform_4(%arg0: i32, %arg1: i32) -> (i32, i32) {
    %c0_i32 = arith.constant 0 : i32
    %c0_i32_0 = arith.constant 0 : i32
    %c0_i32_1 = arith.constant 0 : i32
    return %c0_i32, %c0_i32_0 : i32, i32
  }
  func.func @transform_5(%arg0: i32, %arg1: i32) -> (i32, i32) {
    %c0_i32 = arith.constant 0 : i32
    %c0_i32_0 = arith.constant 0 : i32
    return %arg0, %c0_i32 : i32, i32
  }
}

</mosaic_0001>

<llo_original>
// kernel: tpu_custom_call.1
$region0: #{tpu_custom_call.1}
  #allocation0 [shape = 'u32[]', space=smem, size = 0x4, offset = 0x4, fixed_abs, tag = 'smem constant byte address 0x4 - core index']
  #allocation1 [shape = 'u32[144,128]{1,0:T(1,128)}', space=vmem, size = 0x12000, scoped, tag = 'internal scratch']
  #allocation2 [shape = 'f32[64,128]{1,0:T(8,128)}', space=vmem, size = 0x8000, scoped, tag = 'scratch operand']
  %s0 = inlined_call_operand.hbm [shape: f32[128,128], index: 0, kind: input, shape index: {}]
  %s1 = inlined_call_operand.hbm [shape: f32[128,512], index: 1, kind: input, shape index: {}]
  %s2 = inlined_call_operand.hbm [shape: f32[1,512], index: 2, kind: input, shape index: {}]
  %s3 = inlined_call_operand.hbm [shape: f32[512,128], index: 3, kind: input, shape index: {}]
  %s4 = inlined_call_operand.hbm [shape: f32[1,128], index: 4, kind: input, shape index: {}]
  %s5 = inlined_call_operand.hbm [shape: f32[128,128], index: 5, kind: output, shape index: {}]
  %s6 = sld [smem:[#allocation0]]
  $region81: #{tpu_custom_call.1} parent=0
    _
  %s8 = ssub.s32 1, %s6
  %s9 = scalar_select 0, %s8, %s6
  $region1: #{tpu_custom_call.1} parent=0
    #allocation3 [shape = 'u8[65536]{0}', space=vmem, size = 0x10000, scoped, tag = 'input window, operand 0']
    #allocation4 [shape = 's32[2]{0}', space=sflag, size = 0x8, scoped, tag = 'scoped memory for tpu_custom_call.1']
    #allocation5 [shape = 's32[2]{0}', space=sflag, size = 0x8, scoped, tag = 'scoped memory for tpu_custom_call.1']
    #allocation6 [shape = 'u8[262144]{0}', space=vmem, size = 0x40000, scoped, tag = 'input window, operand 1, single buffered']
    #allocation7 [shape = 's32[1]{0}', space=sflag, size = 0x4, scoped, tag = 'scoped memory for tpu_custom_call.1']
    #allocation8 [shape = 'u8[2048]{0}', space=vmem, size = 0x800, scoped, tag = 'input window, operand 2, single buffered']
    #allocation9 [shape = 'u8[262144]{0}', space=vmem, size = 0x40000, scoped, tag = 'input window, operand 3, single buffered']
    #allocation10 [shape = 's32[1]{0}', space=sflag, size = 0x4, scoped, tag = 'scoped memory for tpu_custom_call.1']
    #allocation11 [shape = 'u8[512]{0}', space=vmem, size = 0x400, scoped, tag = 'input window, operand 4, single buffered']
    #allocation12 [shape = 'u8[65536]{0}', space=vmem, size = 0x10000, scoped, tag = 'output window, operand 0']
    %10 = vsyncpa [#allocation4], 0
    %s11 = scalar_lea.sflag [#allocation4], 1
    %12 = vsyncpa %s11, 0
    %13 = vsyncpa [#allocation7], 0
    %14 = vsyncpa [#allocation10], 0
    %15 = vsyncpa [#allocation5], 0
    %s16 = scalar_lea.sflag [#allocation5], 1
    %17 = vsyncpa %s16, 0
    loop: start=0, step=1, limit=4
    $region2: #{tpu_custom_call.1} parent=1 // loop_pre_header
      _
    $region3: #{tpu_custom_call.1} parent=1 // loop_header
      %s19 = sphi 0, %s23
      %p20 = scmp.ge.s32.totalorder %s19, 4
      %s26 = sphi 0, %s38
      %s27 = sphi 0, %s34
      %s28 = sphi 0, %s26
      %s29 = sphi 0, %s27
      %s30 = sphi 0, %s28
      %s31 = sphi 0, %s29
      %s41 = sphi 0, %s43
      %s44 = sphi 0, %s41
      %s45 = sphi 0, %s44
      %s61 = sphi 0, %s45
      %s67 = sphi 0, %s69
      %s70 = sphi 0, %s67
      %s71 = sphi 0, %s70
      %s87 = sphi 0, %s71
      %s93 = sphi 0, %s95
      %s96 = sphi 0, %s93
      %s97 = sphi 0, %s96
      %s113 = sphi 0, %s97
      %s119 = sphi 0, %s121
      %s122 = sphi 0, %s119
      %s123 = sphi 0, %s122
      %s139 = sphi 0, %s123
      %s143 = sphi 0, %s143
      %s145 = sphi 0, %s143
      %s146 = sphi 0, %s145
      %s160 = sphi 0, %s146
      %s166 = sphi 0, %s168
      %s169 = sphi 0, %s166
      %s170 = sphi 0, %s169
      %s186 = sphi 0, %s170
    $region4: #{tpu_custom_call.1} parent=1 // loop_header_branch
      %22 = sbr.rel (%p20) target = $region8
    $region5: #{tpu_custom_call.1} parent=1 // loop_body
      %s24 = ssub.s32 %s19, 1
      %s25 = ssub.s32 %s19, 2
      %s32 = sadd.s32 1, %s27
      %p33 = scmp.ge.s32.totalorder %s32, 1
      %s34 = scalar_select %p33, 0, %s32
      %s35 = sadd.s32 1, %s26
      %s36 = scalar_select %p33, %s35, %s26
      %p37 = scmp.ge.s32.totalorder %s36, 2
      %s38 = scalar_select %p37, 0, %s36
      %s39 = ssub.s32 %s26, %s38
      %p40 = scmp.eq.s32.totalorder %s39, 0
      %s42 = sadd.s32 %s41, 1
      %s43 = scalar_select %p40, %s41, %s42
      %p46 = pneg %p40
      %p47 = scmp.eq.s32.totalorder %s19, 1
      %p48 = por %p46, %p47
      %p49 = scmp.ne.s32.totalorder %s41, %s44
      %p50 = scmp.eq.s32.totalorder %s19, 0
      %p51 = por %p49, %p50
      %p52 = scmp.ne.s32.totalorder %s41, %s44
      %p53 = scmp.eq.s32.totalorder %s24, 1
      %p54 = por %p52, %p53
      %p55 = scmp.ne.s32.totalorder %s44, %s45
      %p56 = scmp.eq.s32.totalorder %s24, 0
      %p57 = por %p55, %p56
      %p58 = scmp.ne.s32.totalorder %s44, %s45
      %p59 = scmp.eq.s32.totalorder %s25, 1
      %p60 = por %p58, %p59
      %p62 = scmp.ne.s32.totalorder %s45, %s61
      %p63 = scmp.eq.s32.totalorder %s25, 0
      %p64 = por %p62, %p63
      %s65 = ssub.s32 %s27, %s34
      %p66 = scmp.eq.s32.totalorder %s65, 0
      %s68 = sadd.s32 %s67, 1
      %s69 = scalar_select %p66, %s67, %s68
      %p72 = pneg %p66
      %p73 = scmp.eq.s32.totalorder %s19, 1
      %p74 = por %p72, %p73
      %p75 = scmp.ne.s32.totalorder %s67, %s70
      %p76 = scmp.eq.s32.totalorder %s19, 0
      %p77 = por %p75, %p76
      %p78 = scmp.ne.s32.totalorder %s67, %s70
      %p79 = scmp.eq.s32.totalorder %s24, 1
      %p80 = por %p78, %p79
      %p81 = scmp.ne.s32.totalorder %s70, %s71
      %p82 = scmp.eq.s32.totalorder %s24, 0
      %p83 = por %p81, %p82
      %p84 = scmp.ne.s32.totalorder %s70, %s71
      %p85 = scmp.eq.s32.totalorder %s25, 1
      %p86 = por %p84, %p85
      %p88 = scmp.ne.s32.totalorder %s71, %s87
      %p89 = scmp.eq.s32.totalorder %s25, 0
      %p90 = por %p88, %p89
      %s91 = ssub.s32 %s27, %s34
      %p92 = scmp.eq.s32.totalorder %s91, 0
      %s94 = sadd.s32 %s93, 1
      %s95 = scalar_select %p92, %s93, %s94
      %p98 = pneg %p92
      %p99 = scmp.eq.s32.totalorder %s19, 1
      %p100 = por %p98, %p99
      %p101 = scmp.ne.s32.totalorder %s93, %s96
      %p102 = scmp.eq.s32.totalorder %s19, 0
      %p103 = por %p101, %p102
      %p104 = scmp.ne.s32.totalorder %s93, %s96
      %p105 = scmp.eq.s32.totalorder %s24, 1
      %p106 = por %p104, %p105
      %p107 = scmp.ne.s32.totalorder %s96, %s97
      %p108 = scmp.eq.s32.totalorder %s24, 0
      %p109 = por %p107, %p108
      %p110 = scmp.ne.s32.totalorder %s96, %s97
      %p111 = scmp.eq.s32.totalorder %s25, 1
      %p112 = por %p110, %p111
      %p114 = scmp.ne.s32.totalorder %s97, %s113
      %p115 = scmp.eq.s32.totalorder %s25, 0
      %p116 = por %p114, %p115
      %s117 = ssub.s32 %s27, %s34
      %p118 = scmp.eq.s32.totalorder %s117, 0
      %s120 = sadd.s32 %s119, 1
      %s121 = scalar_select %p118, %s119, %s120
      %p124 = pneg %p118
      %p125 = scmp.eq.s32.totalorder %s19, 1
      %p126 = por %p124, %p125
      %p127 = scmp.ne.s32.totalorder %s119, %s122
      %p128 = scmp.eq.s32.totalorder %s19, 0
      %p129 = por %p127, %p128
      %p130 = scmp.ne.s32.totalorder %s119, %s122
      %p131 = scmp.eq.s32.totalorder %s24, 1
      %p132 = por %p130, %p131
      %p133 = scmp.ne.s32.totalorder %s122, %s123
      %p134 = scmp.eq.s32.totalorder %s24, 0
      %p135 = por %p133, %p134
      %p136 = scmp.ne.s32.totalorder %s122, %s123
      %p137 = scmp.eq.s32.totalorder %s25, 1
      %p138 = por %p136, %p137
      %p140 = scmp.ne.s32.totalorder %s123, %s139
      %p141 = scmp.eq.s32.totalorder %s25, 0
      %p142 = por %p140, %p141
      %s144 = sadd.s32 %s143, 1
      %p147 = scmp.eq.s32.totalorder %s19, 1
      %p148 = scmp.ne.s32.totalorder %s143, %s145
      %p149 = scmp.eq.s32.totalorder %s19, 0
      %p150 = por %p148, %p149
      %p151 = scmp.ne.s32.totalorder %s143, %s145
      %p152 = scmp.eq.s32.totalorder %s24, 1
      %p153 = por %p151, %p152
      %p154 = scmp.ne.s32.totalorder %s145, %s146
      %p155 = scmp.eq.s32.totalorder %s24, 0
      %p156 = por %p154, %p155
      %p157 = scmp.ne.s32.totalorder %s145, %s146
      %p158 = scmp.eq.s32.totalorder %s25, 1
      %p159 = por %p157, %p158
      %p161 = scmp.ne.s32.totalorder %s146, %s160
      %p162 = scmp.eq.s32.totalorder %s25, 0
      %p163 = por %p161, %p162
      %s164 = ssub.s32 %s26, %s38
      %p165 = scmp.eq.s32.totalorder %s164, 0
      %s167 = sadd.s32 %s166, 1
      %s168 = scalar_select %p165, %s166, %s167
      %p171 = pneg %p165
      %p172 = scmp.eq.s32.totalorder %s19, 1
      %p173 = por %p171, %p172
      %p174 = scmp.ne.s32.totalorder %s166, %s169
      %p175 = scmp.eq.s32.totalorder %s19, 0
      %p176 = por %p174, %p175
      %p177 = scmp.ne.s32.totalorder %s166, %s169
      %p178 = scmp.eq.s32.totalorder %s24, 1
      %p179 = por %p177, %p178
      %p180 = scmp.ne.s32.totalorder %s169, %s170
      %p181 = scmp.eq.s32.totalorder %s24, 0
      %p182 = por %p180, %p181
      %p183 = scmp.ne.s32.totalorder %s169, %s170
      %p184 = scmp.eq.s32.totalorder %s25, 1
      %p185 = por %p183, %p184
      %p187 = scmp.ne.s32.totalorder %s170, %s186
      %p188 = scmp.eq.s32.totalorder %s25, 0
      %p189 = por %p187, %p188
      %p190 = scmp.le.s32.totalorder 1, %s19
      %p191 = scmp.lt.s32.totalorder %s19, 3
      %p192 = pnand %p190, %p191
      %p193 = pneg %p192
      // Predicated region
      $region9: #{tpu_custom_call.1} parent=5 // pred_check
        _
      $region10: #{tpu_custom_call.1} parent=5 // pred_check_branch
        %195 = sbr.rel (%p192) target = $region12
      $region11: #{tpu_custom_call.1} parent=5 // pred_region
        %s196 = ssub.s32 %s19, 1
        // Predicated region
        $region13: #{tpu_custom_call.1} parent=11 // pred_check
          %p197 = pneg %p83
        $region14: #{tpu_custom_call.1} parent=11 // pred_check_branch
          %199 = sbr.rel (%p197) target = $region16
        $region15: #{tpu_custom_call.1} parent=11 // pred_region
          %s200 = smul.u32 4, %s29
          %s202 = ssub.s32 8192, 8192
          %203 = vsyncadd [#allocation7], %s202
          %s204 = smul.addr %s200, 128
          %s205 = scalar_lea.hbm %s1, %s204
          %s206 = sshll.u32 [#allocation6], 4
          %s207 = int_to_ptr.vmem [resolvable:$true] %s206
          %212 = dma.hbm_to_vmem [thread:$0]  %s205, 8192, %s207, [#allocation7], 512, 512, 32
        $region16: #{tpu_custom_call.1} parent=11 // pred_fallthru
          _
        // Predicated region
        $region17: #{tpu_custom_call.1} parent=11 // pred_check
          %p213 = pneg %p109
        $region18: #{tpu_custom_call.1} parent=11 // pred_check_branch
          %215 = sbr.rel (%p213) target = $region20
        $region19: #{tpu_custom_call.1} parent=11 // pred_region
          %s216 = smul.u32 4, %s29
          %s218 = ssub.s32 64, 64
          %219 = vsyncadd [#allocation7], %s218
          %s220 = smul.addr %s216, 16
          %s221 = scalar_lea.hbm %s2, %s220
          %s223 = sshll.u32 [#allocation8], 4
          %s224 = int_to_ptr.vmem [resolvable:$true] %s223
          %226 = dma.hbm_to_vmem [thread:$0]  %s221, 64, %s224, [#allocation7]
        $region20: #{tpu_custom_call.1} parent=11 // pred_fallthru
          _
        // Predicated region
        $region21: #{tpu_custom_call.1} parent=11 // pred_check
          %p227 = pneg %p135
        $region22: #{tpu_custom_call.1} parent=11 // pred_check_branch
          %229 = sbr.rel (%p227) target = $region24
        $region23: #{tpu_custom_call.1} parent=11 // pred_region
          %s230 = smul.u32 64, %s29
          %s232 = ssub.s32 8192, 8192
          %233 = vsyncadd [#allocation10], %s232
          %s234 = smul.addr %s230, 128
          %s235 = scalar_lea.hbm %s3, %s234
          %s236 = sshll.u32 [#allocation9], 4
          %s237 = int_to_ptr.vmem [resolvable:$true] %s236
          %242 = dma.hbm_to_vmem [thread:$0]  %s235, 8192, %s237, [#allocation10], 128, 128, 8
        $region24: #{tpu_custom_call.1} parent=11 // pred_fallthru
          _
        // Predicated region
        $region25: #{tpu_custom_call.1} parent=11 // pred_check
          %p243 = pneg %p156
        $region26: #{tpu_custom_call.1} parent=11 // pred_check_branch
          %245 = sbr.rel (%p243) target = $region28
        $region27: #{tpu_custom_call.1} parent=11 // pred_region
          %s247 = ssub.s32 16, 16
          %248 = vsyncadd [#allocation10], %s247
          %s250 = sshll.u32 [#allocation11], 4
          %s251 = int_to_ptr.vmem [resolvable:$true] %s250
          %253 = dma.hbm_to_vmem [thread:$0]  %s4, 16, %s251, [#allocation10]
        $region28: #{tpu_custom_call.1} parent=11 // pred_fallthru
          _
      $region12: #{tpu_custom_call.1} parent=5 // pred_fallthru
        _
      %p254 = scmp.lt.s32.totalorder %s19, 2
      // Predicated region
      $region29: #{tpu_custom_call.1} parent=5 // pred_check
        %p255 = pneg %p254
      $region30: #{tpu_custom_call.1} parent=5 // pred_check_branch
        %257 = sbr.rel (%p255) target = $region32
      $region31: #{tpu_custom_call.1} parent=5 // pred_region
        // Predicated region
        $region33: #{tpu_custom_call.1} parent=31 // pred_check
          %p258 = pneg %p51
        $region34: #{tpu_custom_call.1} parent=31 // pred_check_branch
          %260 = sbr.rel (%p258) target = $region36
        $region35: #{tpu_custom_call.1} parent=31 // pred_region
          %s261 = sand.u32 %s41, 1
          %s262 = scalar_lea.sflag [#allocation4], %s261
          %s263 = sand.u32 %s41, 1
          %s264 = smul.addr %s263, 64
          %s265 = scalar_lea.vmem [#allocation3], %s264
          %s266 = smul.u32 8, %s26
          %s268 = ssub.s32 1024, 1024
          %269 = vsyncadd %s262, %s268
          %s270 = smul.addr %s266, 128
          %s271 = scalar_lea.hbm %s0, %s270
          %s272 = sshll.u32 %s265, 4
          %s273 = int_to_ptr.vmem [resolvable:$true] %s272
          %278 = dma.hbm_to_vmem [thread:$0]  %s271, 1024, %s273, %s262, 128, 128, 8
        $region36: #{tpu_custom_call.1} parent=31 // pred_fallthru
          _
      $region32: #{tpu_custom_call.1} parent=5 // pred_fallthru
        _
      %p279 = scmp.le.s32.totalorder 1, %s19
      %p280 = scmp.lt.s32.totalorder %s19, 3
      %p281 = pnand %p279, %p280
      %p282 = pneg %p281
      // Predicated region
      $region37: #{tpu_custom_call.1} parent=5 // pred_check
        _
      $region38: #{tpu_custom_call.1} parent=5 // pred_check_branch
        %284 = sbr.rel (%p281) target = $region40
      $region39: #{tpu_custom_call.1} parent=5 // pred_region
        %s285 = ssub.s32 %s19, 1
        %s286 = sand.u32 %s44, 1
        %s287 = scalar_lea.sflag [#allocation4], %s286
        %s288 = sand.u32 %s44, 1
        %s289 = smul.addr %s288, 64
        %s290 = scalar_lea.vmem [#allocation3], %s289
        // Predicated region
        $region41: #{tpu_custom_call.1} parent=39 // pred_check
          %p291 = pneg %p57
        $region42: #{tpu_custom_call.1} parent=39 // pred_check_branch
          %293 = sbr.rel (%p291) target = $region44
        $region43: #{tpu_custom_call.1} parent=39 // pred_region
          %294 = dma.done %s287, 1024
        $region44: #{tpu_custom_call.1} parent=39 // pred_fallthru
          _
        // Predicated region
        $region45: #{tpu_custom_call.1} parent=39 // pred_check
          %p295 = pneg %p83
        $region46: #{tpu_custom_call.1} parent=39 // pred_check_branch
          %297 = sbr.rel (%p295) target = $region48
        $region47: #{tpu_custom_call.1} parent=39 // pred_region
          %298 = dma.done [#allocation7], 8192
        $region48: #{tpu_custom_call.1} parent=39 // pred_fallthru
          _
        // Predicated region
        $region49: #{tpu_custom_call.1} parent=39 // pred_check
          %p299 = pneg %p109
        $region50: #{tpu_custom_call.1} parent=39 // pred_check_branch
          %301 = sbr.rel (%p299) target = $region52
        $region51: #{tpu_custom_call.1} parent=39 // pred_region
          %302 = dma.done [#allocation7], 64
        $region52: #{tpu_custom_call.1} parent=39 // pred_fallthru
          _
        // Predicated region
        $region53: #{tpu_custom_call.1} parent=39 // pred_check
          %p303 = pneg %p135
        $region54: #{tpu_custom_call.1} parent=39 // pred_check_branch
          %305 = sbr.rel (%p303) target = $region56
        $region55: #{tpu_custom_call.1} parent=39 // pred_region
          %306 = dma.done [#allocation10], 8192
        $region56: #{tpu_custom_call.1} parent=39 // pred_fallthru
          _
        // Predicated region
        $region57: #{tpu_custom_call.1} parent=39 // pred_check
          %p307 = pneg %p156
        $region58: #{tpu_custom_call.1} parent=39 // pred_check_branch
          %309 = sbr.rel (%p307) target = $region60
        $region59: #{tpu_custom_call.1} parent=39 // pred_region
          %310 = dma.done [#allocation10], 16
        $region60: #{tpu_custom_call.1} parent=39 // pred_fallthru
          _
        %s311 = sand.u32 %s44, 1
        %s312 = scalar_lea.sflag [#allocation4], %s311
        %s313 = sand.u32 %s44, 1
        %s314 = smul.addr %s313, 64
        %s315 = scalar_lea.vmem [#allocation3], %s314
        %p316 = pneg %p57
        %p317 = pneg %p54
        %p318 = pneg %p83
        %p319 = pneg %p80
        %p320 = pneg %p109
        %p321 = pneg %p106
        %p322 = pneg %p135
        %p323 = pneg %p132
        %p324 = pneg %p156
        %p325 = pneg %p153
        %p326 = pneg %p182
        %p327 = pneg %p179
        %s328 = sand.u32 %s169, 1
        %s329 = scalar_lea.sflag [#allocation5], %s328
        %s330 = sand.u32 %s169, 1
        %s331 = smul.addr %s330, 64
        %s332 = scalar_lea.vmem [#allocation12], %s331
        %s333 = smul.u32 8, %s28
        %s334 = smul.u32 4, %s29
        %s335 = smul.u32 4, %s29
        %s336 = smul.u32 64, %s29
        %s337 = smul.u32 8, %s28
        %p338 = scmp.eq.s32.totalorder %s29, 0
        // Predicated region
        $region61: #{tpu_custom_call.1} parent=39 // pred_check
          %p339 = pneg %p338
        $region62: #{tpu_custom_call.1} parent=39 // pred_check_branch
          %341 = sbr.rel (%p339) target = $region64
        $region63: #{tpu_custom_call.1} parent=39 // pred_region
          %342 = vst [vmem:[#allocation2] sm:$0xff] 0.0
          %343 = vst [vmem:[#allocation2 + $0x8] sm:$0xff] 0.0
          %344 = vst [vmem:[#allocation2 + $0x10] sm:$0xff] 0.0
          %345 = vst [vmem:[#allocation2 + $0x18] sm:$0xff] 0.0
          %346 = vst [vmem:[#allocation2 + $0x20] sm:$0xff] 0.0
          %347 = vst [vmem:[#allocation2 + $0x28] sm:$0xff] 0.0
          %348 = vst [vmem:[#allocation2 + $0x30] sm:$0xff] 0.0
          %349 = vst [vmem:[#allocation2 + $0x38] sm:$0xff] 0.0
        $region64: #{tpu_custom_call.1} parent=39 // pred_fallthru
          _
        %v350 = vld [vmem:[%s290] sm:$0xff]
        %v351 = vld [vmem:[%s290 + $0x8] sm:$0xff]
        %v352 = vld [vmem:[%s290 + $0x10] sm:$0xff]
        %v353 = vld [vmem:[%s290 + $0x18] sm:$0xff]
        %v354 = vld [vmem:[%s290 + $0x20] sm:$0xff]
        %v355 = vld [vmem:[%s290 + $0x28] sm:$0xff]
        %v356 = vld [vmem:[%s290 + $0x30] sm:$0xff]
        %v357 = vld [vmem:[%s290 + $0x38] sm:$0xff]
        %v358 = vld [vmem:[#allocation6] sm:$0xff]
        %v359 = vld [vmem:[#allocation6 + $0x8] sm:$0xff]
        %v360 = vld [vmem:[#allocation6 + $0x10] sm:$0xff]
        %v361 = vld [vmem:[#allocation6 + $0x18] sm:$0xff]
        %v362 = vld [vmem:[#allocation6 + $0x20] sm:$0xff]
        %v363 = vld [vmem:[#allocation6 + $0x28] sm:$0xff]
        %v364 = vld [vmem:[#allocation6 + $0x30] sm:$0xff]
        %v365 = vld [vmem:[#allocation6 + $0x38] sm:$0xff]
        %v366 = vld [vmem:[#allocation6 + $0x40] sm:$0xff]
        %v367 = vld [vmem:[#allocation6 + $0x48] sm:$0xff]
        %v368 = vld [vmem:[#allocation6 + $0x50] sm:$0xff]
        %v369 = vld [vmem:[#allocation6 + $0x58] sm:$0xff]
        %v370 = vld [vmem:[#allocation6 + $0x60] sm:$0xff]
        %v371 = vld [vmem:[#allocation6 + $0x68] sm:$0xff]
        %v372 = vld [vmem:[#allocation6 + $0x70] sm:$0xff]
        %v373 = vld [vmem:[#allocation6 + $0x78] sm:$0xff]
        %v374 = vld [vmem:[#allocation6 + $0x80] sm:$0xff]
        %v375 = vld [vmem:[#allocation6 + $0x88] sm:$0xff]
        %v376 = vld [vmem:[#allocation6 + $0x90] sm:$0xff]
        %v377 = vld [vmem:[#allocation6 + $0x98] sm:$0xff]
        %v378 = vld [vmem:[#allocation6 + $0xa0] sm:$0xff]
        %v379 = vld [vmem:[#allocation6 + $0xa8] sm:$0xff]
        %v380 = vld [vmem:[#allocation6 + $0xb0] sm:$0xff]
        %v381 = vld [vmem:[#allocation6 + $0xb8] sm:$0xff]
        %v382 = vld [vmem:[#allocation6 + $0xc0] sm:$0xff]
        %v383 = vld [vmem:[#allocation6 + $0xc8] sm:$0xff]
        %v384 = vld [vmem:[#allocation6 + $0xd0] sm:$0xff]
        %v385 = vld [vmem:[#allocation6 + $0xd8] sm:$0xff]
        %v386 = vld [vmem:[#allocation6 + $0xe0] sm:$0xff]
        %v387 = vld [vmem:[#allocation6 + $0xe8] sm:$0xff]
        %v388 = vld [vmem:[#allocation6 + $0xf0] sm:$0xff]
        %v389 = vld [vmem:[#allocation6 + $0xf8] sm:$0xff]
        %v390 = vld [vmem:[#allocation6 + $0x100] sm:$0xff]
        %v391 = vld [vmem:[#allocation6 + $0x108] sm:$0xff]
        %v392 = vld [vmem:[#allocation6 + $0x110] sm:$0xff]
        %v393 = vld [vmem:[#allocation6 + $0x118] sm:$0xff]
        %v394 = vld [vmem:[#allocation6 + $0x120] sm:$0xff]
        %v395 = vld [vmem:[#allocation6 + $0x128] sm:$0xff]
        %v396 = vld [vmem:[#allocation6 + $0x130] sm:$0xff]
        %v397 = vld [vmem:[#allocation6 + $0x138] sm:$0xff]
        %v398 = vld [vmem:[#allocation6 + $0x140] sm:$0xff]
        %v399 = vld [vmem:[#allocation6 + $0x148] sm:$0xff]
        %v400 = vld [vmem:[#allocation6 + $0x150] sm:$0xff]
        %v401 = vld [vmem:[#allocation6 + $0x158] sm:$0xff]
        %v402 = vld [vmem:[#allocation6 + $0x160] sm:$0xff]
        %v403 = vld [vmem:[#allocation6 + $0x168] sm:$0xff]
        %v404 = vld [vmem:[#allocation6 + $0x170] sm:$0xff]
        %v405 = vld [vmem:[#allocation6 + $0x178] sm:$0xff]
        %v406 = vld [vmem:[#allocation6 + $0x180] sm:$0xff]
        %v407 = vld [vmem:[#allocation6 + $0x188] sm:$0xff]
        %v408 = vld [vmem:[#allocation6 + $0x190] sm:$0xff]
        %v409 = vld [vmem:[#allocation6 + $0x198] sm:$0xff]
        %v410 = vld [vmem:[#allocation6 + $0x1a0] sm:$0xff]
        %v411 = vld [vmem:[#allocation6 + $0x1a8] sm:$0xff]
        %v412 = vld [vmem:[#allocation6 + $0x1b0] sm:$0xff]
        %v413 = vld [vmem:[#allocation6 + $0x1b8] sm:$0xff]
        %v414 = vld [vmem:[#allocation6 + $0x1c0] sm:$0xff]
        %v415 = vld [vmem:[#allocation6 + $0x1c8] sm:$0xff]
        %v416 = vld [vmem:[#allocation6 + $0x1d0] sm:$0xff]
        %v417 = vld [vmem:[#allocation6 + $0x1d8] sm:$0xff]
        %v418 = vld [vmem:[#allocation6 + $0x1e0] sm:$0xff]
        %v419 = vld [vmem:[#allocation6 + $0x1e8] sm:$0xff]
        %v420 = vld [vmem:[#allocation6 + $0x1f0] sm:$0xff]
        %v421 = vld [vmem:[#allocation6 + $0x1f8] sm:$0xff]
        %v422 = vld [vmem:[#allocation8] sm:$0xf]
        %v424 = vlaneseq
        %v425 = vshrl.u32 %v424, 7
        %v426 = vsub.s32 0, %v425
        %v427 = vrot.slane %v422, %v426
        %v428 = vlaneseq
        %v429 = vshrl.u32 %v428, 7
        %v430 = vsub.s32 1, %v429
        %v431 = vrot.slane %v422, %v430
        %v432 = vlaneseq
        %v433 = vshrl.u32 %v432, 7
        %v434 = vsub.s32 2, %v433
        %v435 = vrot.slane %v422, %v434
        %v436 = vlaneseq
        %v437 = vshrl.u32 %v436, 7
        %v438 = vsub.s32 3, %v437
        %v439 = vrot.slane %v422, %v438
        %444 = vmatprep.subr.mxu0 %v359
        %445 = vmatpush1.msra.mxu0 %v358
        %446 = vmatprep.subr.mxu0 %v363
        %447 = vmatpush1.msra.mxu0 %v362
        %448 = vmatprep.subr.mxu0 %v367
        %449 = vmatpush1.msra.mxu0 %v366
        %450 = vmatprep.subr.mxu0 %v371
        %451 = vmatpush1.msra.mxu0 %v370
        %452 = vmatprep.subr.mxu0 %v375
        %453 = vmatpush1.msra.mxu0 %v374
        %454 = vmatprep.subr.mxu0 %v379
        %455 = vmatpush1.msra.mxu0 %v378
        %456 = vmatprep.subr.mxu0 %v383
        %457 = vmatpush1.msra.mxu0 %v382
        %458 = vmatprep.subr.mxu0 %v387
        %459 = vmatpush1.msra.mxu0 %v386
        %460 = vmatprep.subr.mxu0 %v391
        %461 = vmatpush1.msra.mxu0 %v390
        %462 = vmatprep.subr.mxu0 %v395
        %463 = vmatpush1.msra.mxu0 %v394
        %464 = vmatprep.subr.mxu0 %v399
        %465 = vmatpush1.msra.mxu0 %v398
        %466 = vmatprep.subr.mxu0 %v403
        %467 = vmatpush1.msra.mxu0 %v402
        %468 = vmatprep.subr.mxu0 %v407
        %469 = vmatpush1.msra.mxu0 %v406
        %470 = vmatprep.subr.mxu0 %v411
        %471 = vmatpush1.msra.mxu0 %v410
        %472 = vmatprep.subr.mxu0 %v415
        %473 = vmatpush1.msra.mxu0 %v414
        %474 = vmatprep.subr.mxu0 %v419
        %475 = vmatpush1.msra.mxu0 %v418
        %476 = vmatprep.subr.mxu0 0.0
        %477 = vmatpush1.msra.mxu0 0.0
        %478 = vmatprep.subr.mxu0 0.0
        %479 = vmatpush1.msra.mxu0 0.0
        %480 = vmatprep.subr.mxu0 0.0
        %481 = vmatpush1.msra.mxu0 0.0
        %482 = vmatprep.subr.mxu0 0.0
        %483 = vmatpush1.msra.mxu0 0.0
        %484 = vmatprep.subr.mxu0 0.0
        %485 = vmatpush1.msra.mxu0 0.0
        %486 = vmatprep.subr.mxu0 0.0
        %487 = vmatpush1.msra.mxu0 0.0
        %488 = vmatprep.subr.mxu0 0.0
        %489 = vmatpush1.msra.mxu0 0.0
        %490 = vmatprep.subr.mxu0 0.0
        %491 = vmatpush1.msra.mxu0 0.0
        %492 = vmatprep.subr.mxu0 0.0
        %493 = vmatpush1.msra.mxu0 0.0
        %494 = vmatprep.subr.mxu0 0.0
        %495 = vmatpush1.msra.mxu0 0.0
        %496 = vmatprep.subr.mxu0 0.0
        %497 = vmatpush1.msra.mxu0 0.0
        %498 = vmatprep.subr.mxu0 0.0
        %499 = vmatpush1.msra.mxu0 0.0
        %500 = vmatprep.subr.mxu0 0.0
        %501 = vmatpush1.msra.mxu0 0.0
        %502 = vmatprep.subr.mxu0 0.0
        %503 = vmatpush1.msra.mxu0 0.0
        %504 = vmatprep.subr.mxu0 0.0
        %505 = vmatpush1.msra.mxu0 0.0
        %506 = vmatprep.subr.mxu0 0.0
        %507 = vmatpush1.msra.mxu0 0.0
        %508 = vmatprep.mubr.f32.mxu0 0.0
        %509 = vmatmul.mubr.f32.gmra.mrb[0].mxu0 %v350
        %v510 = vpop.f32.mrb[0].mxu0
        %v511 = vadd.f32 %v427, %v510
        %v512 = vpop.f32.mrb[0].mxu0
        %v513 = vadd.f32 %v431, %v512
        %514 = vmatprep.mubr.f32.mxu0 0.0
        %515 = vmatmul.mubr.f32.gmra.mrb[0].mxu0 %v351
        %v516 = vpop.f32.mrb[0].mxu0
        %v517 = vadd.f32 %v427, %v516
        %v518 = vpop.f32.mrb[0].mxu0
        %v519 = vadd.f32 %v431, %v518
        %520 = vmatprep.mubr.f32.mxu0 0.0
        %521 = vmatmul.mubr.f32.gmra.mrb[0].mxu0 %v352
        %v522 = vpop.f32.mrb[0].mxu0
        %v523 = vadd.f32 %v427, %v522
        %v524 = vpop.f32.mrb[0].mxu0
        %v525 = vadd.f32 %v431, %v524
        %526 = vmatprep.mubr.f32.mxu0 0.0
        %527 = vmatmul.mubr.f32.gmra.mrb[0].mxu0 %v353
        %v528 = vpop.f32.mrb[0].mxu0
        %v529 = vadd.f32 %v427, %v528
        %v530 = vpop.f32.mrb[0].mxu0
        %v531 = vadd.f32 %v431, %v530
        %532 = vmatprep.mubr.f32.mxu0 0.0
        %533 = vmatmul.mubr.f32.gmra.mrb[0].mxu0 %v354
        %v534 = vpop.f32.mrb[0].mxu0
        %v535 = vadd.f32 %v427, %v534
        %v536 = vpop.f32.mrb[0].mxu0
        %v537 = vadd.f32 %v431, %v536
        %538 = vmatprep.mubr.f32.mxu0 0.0
        %539 = vmatmul.mubr.f32.gmra.mrb[0].mxu0 %v355
        %v540 = vpop.f32.mrb[0].mxu0
        %v541 = vadd.f32 %v427, %v540
        %v542 = vpop.f32.mrb[0].mxu0
        %v543 = vadd.f32 %v431, %v542
        %544 = vmatprep.mubr.f32.mxu0 0.0
        %545 = vmatmul.mubr.f32.gmra.mrb[0].mxu0 %v356
        %v546 = vpop.f32.mrb[0].mxu0
        %v547 = vadd.f32 %v427, %v546
        %v548 = vpop.f32.mrb[0].mxu0
        %v549 = vadd.f32 %v431, %v548
        %550 = vmatprep.mubr.f32.mxu0 0.0
        %551 = vmatmul.mubr.f32.gmra.mrb[0].mxu0 %v357
        %v552 = vpop.f32.mrb[0].mxu0
        %v553 = vadd.f32 %v427, %v552
        %v554 = vpop.f32.mrb[0].mxu0
        %v555 = vadd.f32 %v431, %v554
        %556 = vdwg.mxu0
        %557 = vmatprep.subr.mxu0 %v361
        %558 = vmatpush1.msra.mxu0 %v360
        %559 = vmatprep.subr.mxu0 %v365
        %560 = vmatpush1.msra.mxu0 %v364
        %561 = vmatprep.subr.mxu0 %v369
        %562 = vmatpush1.msra.mxu0 %v368
        %563 = vmatprep.subr.mxu0 %v373
        %564 = vmatpush1.msra.mxu0 %v372
        %565 = vmatprep.subr.mxu0 %v377
        %566 = vmatpush1.msra.mxu0 %v376
        %567 = vmatprep.subr.mxu0 %v381
        %568 = vmatpush1.msra.mxu0 %v380
        %569 = vmatprep.subr.mxu0 %v385
        %570 = vmatpush1.msra.mxu0 %v384
        %571 = vmatprep.subr.mxu0 %v389
        %572 = vmatpush1.msra.mxu0 %v388
        %573 = vmatprep.subr.mxu0 %v393
        %574 = vmatpush1.msra.mxu0 %v392
        %575 = vmatprep.subr.mxu0 %v397
        %576 = vmatpush1.msra.mxu0 %v396
        %577 = vmatprep.subr.mxu0 %v401
        %578 = vmatpush1.msra.mxu0 %v400
        %579 = vmatprep.subr.mxu0 %v405
        %580 = vmatpush1.msra.mxu0 %v404
        %581 = vmatprep.subr.mxu0 %v409
        %582 = vmatpush1.msra.mxu0 %v408
        %583 = vmatprep.subr.mxu0 %v413
        %584 = vmatpush1.msra.mxu0 %v412
        %585 = vmatprep.subr.mxu0 %v417
        %586 = vmatpush1.msra.mxu0 %v416
        %587 = vmatprep.subr.mxu0 %v421
        %588 = vmatpush1.msra.mxu0 %v420
        %589 = vmatprep.subr.mxu0 0.0
        %590 = vmatpush1.msra.mxu0 0.0
        %591 = vmatprep.subr.mxu0 0.0
        %592 = vmatpush1.msra.mxu0 0.0
        %593 = vmatprep.subr.mxu0 0.0
        %594 = vmatpush1.msra.mxu0 0.0
        %595 = vmatprep.subr.mxu0 0.0
        %596 = vmatpush1.msra.mxu0 0.0
        %597 = vmatprep.subr.mxu0 0.0
        %598 = vmatpush1.msra.mxu0 0.0
        %599 = vmatprep.subr.mxu0 0.0
        %600 = vmatpush1.msra.mxu0 0.0
        %601 = vmatprep.subr.mxu0 0.0
        %602 = vmatpush1.msra.mxu0 0.0
        %603 = vmatprep.subr.mxu0 0.0
        %604 = vmatpush1.msra.mxu0 0.0
        %605 = vmatprep.subr.mxu0 0.0
        %606 = vmatpush1.msra.mxu0 0.0
        %607 = vmatprep.subr.mxu0 0.0
        %608 = vmatpush1.msra.mxu0 0.0
        %609 = vmatprep.subr.mxu0 0.0
        %610 = vmatpush1.msra.mxu0 0.0
        %611 = vmatprep.subr.mxu0 0.0
        %612 = vmatpush1.msra.mxu0 0.0
        %613 = vmatprep.subr.mxu0 0.0
        %614 = vmatpush1.msra.mxu0 0.0
        %615 = vmatprep.subr.mxu0 0.0
        %616 = vmatpush1.msra.mxu0 0.0
        %617 = vmatprep.subr.mxu0 0.0
        %618 = vmatpush1.msra.mxu0 0.0
        %619 = vmatprep.subr.mxu0 0.0
        %620 = vmatpush1.msra.mxu0 0.0
        %621 = vmatprep.mubr.f32.mxu0 0.0
        %622 = vmatmul.mubr.f32.gmra.mrb[0].mxu0 %v350
        %v623 = vpop.f32.mrb[0].mxu0
        %v624 = vadd.f32 %v435, %v623
        %v625 = vpop.f32.mrb[0].mxu0
        %v626 = vadd.f32 %v439, %v625
        %627 = vmatprep.mubr.f32.mxu0 0.0
        %628 = vmatmul.mubr.f32.gmra.mrb[0].mxu0 %v351
        %v629 = vpop.f32.mrb[0].mxu0
        %v630 = vadd.f32 %v435, %v629
        %v631 = vpop.f32.mrb[0].mxu0
        %v632 = vadd.f32 %v439, %v631
        %633 = vmatprep.mubr.f32.mxu0 0.0
        %634 = vmatmul.mubr.f32.gmra.mrb[0].mxu0 %v352
        %v635 = vpop.f32.mrb[0].mxu0
        %v636 = vadd.f32 %v435, %v635
        %v637 = vpop.f32.mrb[0].mxu0
        %v638 = vadd.f32 %v439, %v637
        %639 = vmatprep.mubr.f32.mxu0 0.0
        %640 = vmatmul.mubr.f32.gmra.mrb[0].mxu0 %v353
        %v641 = vpop.f32.mrb[0].mxu0
        %v642 = vadd.f32 %v435, %v641
        %v643 = vpop.f32.mrb[0].mxu0
        %v644 = vadd.f32 %v439, %v643
        %645 = vmatprep.mubr.f32.mxu0 0.0
        %646 = vmatmul.mubr.f32.gmra.mrb[0].mxu0 %v354
        %v647 = vpop.f32.mrb[0].mxu0
        %v648 = vadd.f32 %v435, %v647
        %v649 = vpop.f32.mrb[0].mxu0
        %v650 = vadd.f32 %v439, %v649
        %651 = vmatprep.mubr.f32.mxu0 0.0
        %652 = vmatmul.mubr.f32.gmra.mrb[0].mxu0 %v355
        %v653 = vpop.f32.mrb[0].mxu0
        %v654 = vadd.f32 %v435, %v653
        %v655 = vpop.f32.mrb[0].mxu0
        %v656 = vadd.f32 %v439, %v655
        %657 = vmatprep.mubr.f32.mxu0 0.0
        %658 = vmatmul.mubr.f32.gmra.mrb[0].mxu0 %v356
        %v659 = vpop.f32.mrb[0].mxu0
        %v660 = vadd.f32 %v435, %v659
        %v661 = vpop.f32.mrb[0].mxu0
        %v662 = vadd.f32 %v439, %v661
        %663 = vmatprep.mubr.f32.mxu0 0.0
        %664 = vmatmul.mubr.f32.gmra.mrb[0].mxu0 %v357
        %v665 = vpop.f32.mrb[0].mxu0
        %v666 = vadd.f32 %v435, %v665
        %v667 = vpop.f32.mrb[0].mxu0
        %v668 = vadd.f32 %v439, %v667
        %669 = vdwg.mxu0
        %v670 = vmul.f32 %v511, %v511
        %v671 = vmul.f32 %v513, %v513
        %v672 = vmul.f32 %v624, %v624
        %v673 = vmul.f32 %v626, %v626
        %v674 = vmul.f32 %v517, %v517
        %v675 = vmul.f32 %v519, %v519
        %v676 = vmul.f32 %v630, %v630
        %v677 = vmul.f32 %v632, %v632
        %v678 = vmul.f32 %v523, %v523
        %v679 = vmul.f32 %v525, %v525
        %v680 = vmul.f32 %v636, %v636
        %v681 = vmul.f32 %v638, %v638
        %v682 = vmul.f32 %v529, %v529
        %v683 = vmul.f32 %v531, %v531
        %v684 = vmul.f32 %v642, %v642
        %v685 = vmul.f32 %v644, %v644
        %v686 = vmul.f32 %v535, %v535
        %v687 = vmul.f32 %v537, %v537
        %v688 = vmul.f32 %v648, %v648
        %v689 = vmul.f32 %v650, %v650
        %v690 = vmul.f32 %v541, %v541
        %v691 = vmul.f32 %v543, %v543
        %v692 = vmul.f32 %v654, %v654
        %v693 = vmul.f32 %v656, %v656
        %v694 = vmul.f32 %v547, %v547
        %v695 = vmul.f32 %v549, %v549
        %v696 = vmul.f32 %v660, %v660
        %v697 = vmul.f32 %v662, %v662
        %v698 = vmul.f32 %v553, %v553
        %v699 = vmul.f32 %v555, %v555
        %v700 = vmul.f32 %v666, %v666
        %v701 = vmul.f32 %v668, %v668
        %v702 = vmul.f32 %v511, %v670
        %v703 = vmul.f32 %v513, %v671
        %v704 = vmul.f32 %v624, %v672
        %v705 = vmul.f32 %v626, %v673
        %v706 = vmul.f32 %v517, %v674
        %v707 = vmul.f32 %v519, %v675
        %v708 = vmul.f32 %v630, %v676
        %v709 = vmul.f32 %v632, %v677
        %v710 = vmul.f32 %v523, %v678
        %v711 = vmul.f32 %v525, %v679
        %v712 = vmul.f32 %v636, %v680
        %v713 = vmul.f32 %v638, %v681
        %v714 = vmul.f32 %v529, %v682
        %v715 = vmul.f32 %v531, %v683
        %v716 = vmul.f32 %v642, %v684
        %v717 = vmul.f32 %v644, %v685
        %v718 = vmul.f32 %v535, %v686
        %v719 = vmul.f32 %v537, %v687
        %v720 = vmul.f32 %v648, %v688
        %v721 = vmul.f32 %v650, %v689
        %v722 = vmul.f32 %v541, %v690
        %v723 = vmul.f32 %v543, %v691
        %v724 = vmul.f32 %v654, %v692
        %v725 = vmul.f32 %v656, %v693
        %v726 = vmul.f32 %v547, %v694
        %v727 = vmul.f32 %v549, %v695
        %v728 = vmul.f32 %v660, %v696
        %v729 = vmul.f32 %v662, %v697
        %v730 = vmul.f32 %v553, %v698
        %v731 = vmul.f32 %v555, %v699
        %v732 = vmul.f32 %v666, %v700
        %v733 = vmul.f32 %v668, %v701
        %v734 = vmul.f32 %v702, 0.044715
        %v735 = vmul.f32 %v703, 0.044715
        %v736 = vmul.f32 %v704, 0.044715
        %v737 = vmul.f32 %v705, 0.044715
        %v738 = vmul.f32 %v706, 0.044715
        %v739 = vmul.f32 %v707, 0.044715
        %v740 = vmul.f32 %v708, 0.044715
        %v741 = vmul.f32 %v709, 0.044715
        %v742 = vmul.f32 %v710, 0.044715
        %v743 = vmul.f32 %v711, 0.044715
        %v744 = vmul.f32 %v712, 0.044715
        %v745 = vmul.f32 %v713, 0.044715
        %v746 = vmul.f32 %v714, 0.044715
        %v747 = vmul.f32 %v715, 0.044715
        %v748 = vmul.f32 %v716, 0.044715
        %v749 = vmul.f32 %v717, 0.044715
        %v750 = vmul.f32 %v718, 0.044715
        %v751 = vmul.f32 %v719, 0.044715
        %v752 = vmul.f32 %v720, 0.044715
        %v753 = vmul.f32 %v721, 0.044715
        %v754 = vmul.f32 %v722, 0.044715
        %v755 = vmul.f32 %v723, 0.044715
        %v756 = vmul.f32 %v724, 0.044715
        %v757 = vmul.f32 %v725, 0.044715
        %v758 = vmul.f32 %v726, 0.044715
        %v759 = vmul.f32 %v727, 0.044715
        %v760 = vmul.f32 %v728, 0.044715
        %v761 = vmul.f32 %v729, 0.044715
        %v762 = vmul.f32 %v730, 0.044715
        %v763 = vmul.f32 %v731, 0.044715
        %v764 = vmul.f32 %v732, 0.044715
        %v765 = vmul.f32 %v733, 0.044715
        %v766 = vadd.f32 %v511, %v734
        %v767 = vadd.f32 %v513, %v735
        %v768 = vadd.f32 %v624, %v736
        %v769 = vadd.f32 %v626, %v737
        %v770 = vadd.f32 %v517, %v738
        %v771 = vadd.f32 %v519, %v739
        %v772 = vadd.f32 %v630, %v740
        %v773 = vadd.f32 %v632, %v741
        %v774 = vadd.f32 %v523, %v742
        %v775 = vadd.f32 %v525, %v743
        %v776 = vadd.f32 %v636, %v744
        %v777 = vadd.f32 %v638, %v745
        %v778 = vadd.f32 %v529, %v746
        %v779 = vadd.f32 %v531, %v747
        %v780 = vadd.f32 %v642, %v748
        %v781 = vadd.f32 %v644, %v749
        %v782 = vadd.f32 %v535, %v750
        %v783 = vadd.f32 %v537, %v751
        %v784 = vadd.f32 %v648, %v752
        %v785 = vadd.f32 %v650, %v753
        %v786 = vadd.f32 %v541, %v754
        %v787 = vadd.f32 %v543, %v755
        %v788 = vadd.f32 %v654, %v756
        %v789 = vadd.f32 %v656, %v757
        %v790 = vadd.f32 %v547, %v758
        %v791 = vadd.f32 %v549, %v759
        %v792 = vadd.f32 %v660, %v760
        %v793 = vadd.f32 %v662, %v761
        %v794 = vadd.f32 %v553, %v762
        %v795 = vadd.f32 %v555, %v763
        %v796 = vadd.f32 %v666, %v764
        %v797 = vadd.f32 %v668, %v765
        %v798 = vmul.f32 %v766, 0.7978846
        %v799 = vmul.f32 %v767, 0.7978846
        %v800 = vmul.f32 %v768, 0.7978846
        %v801 = vmul.f32 %v769, 0.7978846
        %v802 = vmul.f32 %v770, 0.7978846
        %v803 = vmul.f32 %v771, 0.7978846
        %v804 = vmul.f32 %v772, 0.7978846
        %v805 = vmul.f32 %v773, 0.7978846
        %v806 = vmul.f32 %v774, 0.7978846
        %v807 = vmul.f32 %v775, 0.7978846
        %v808 = vmul.f32 %v776, 0.7978846
        %v809 = vmul.f32 %v777, 0.7978846
        %v810 = vmul.f32 %v778, 0.7978846
        %v811 = vmul.f32 %v779, 0.7978846
        %v812 = vmul.f32 %v780, 0.7978846
        %v813 = vmul.f32 %v781, 0.7978846
        %v814 = vmul.f32 %v782, 0.7978846
        %v815 = vmul.f32 %v783, 0.7978846
        %v816 = vmul.f32 %v784, 0.7978846
        %v817 = vmul.f32 %v785, 0.7978846
        %v818 = vmul.f32 %v786, 0.7978846
        %v819 = vmul.f32 %v787, 0.7978846
        %v820 = vmul.f32 %v788, 0.7978846
        %v821 = vmul.f32 %v789, 0.7978846
        %v822 = vmul.f32 %v790, 0.7978846
        %v823 = vmul.f32 %v791, 0.7978846
        %v824 = vmul.f32 %v792, 0.7978846
        %v825 = vmul.f32 %v793, 0.7978846
        %v826 = vmul.f32 %v794, 0.7978846
        %v827 = vmul.f32 %v795, 0.7978846
        %v828 = vmul.f32 %v796, 0.7978846
        %v829 = vmul.f32 %v797, 0.7978846
        %v830 = vtanh.pop %v798
        %v831 = vtanh.pop %v799
        %v832 = vtanh.pop %v800
        %v833 = vtanh.pop %v801
        %v834 = vtanh.pop %v802
        %v835 = vtanh.pop %v803
        %v836 = vtanh.pop %v804
        %v837 = vtanh.pop %v805
        %v838 = vtanh.pop %v806
        %v839 = vtanh.pop %v807
        %v840 = vtanh.pop %v808
        %v841 = vtanh.pop %v809
        %v842 = vtanh.pop %v810
        %v843 = vtanh.pop %v811
        %v844 = vtanh.pop %v812
        %v845 = vtanh.pop %v813
        %v846 = vtanh.pop %v814
        %v847 = vtanh.pop %v815
        %v848 = vtanh.pop %v816
        %v849 = vtanh.pop %v817
        %v850 = vtanh.pop %v818
        %v851 = vtanh.pop %v819
        %v852 = vtanh.pop %v820
        %v853 = vtanh.pop %v821
        %v854 = vtanh.pop %v822
        %v855 = vtanh.pop %v823
        %v856 = vtanh.pop %v824
        %v857 = vtanh.pop %v825
        %v858 = vtanh.pop %v826
        %v859 = vtanh.pop %v827
        %v860 = vtanh.pop %v828
        %v861 = vtanh.pop %v829
        %v862 = vadd.f32 %v830, 1.0
        %v863 = vadd.f32 %v831, 1.0
        %v864 = vadd.f32 %v832, 1.0
        %v865 = vadd.f32 %v833, 1.0
        %v866 = vadd.f32 %v834, 1.0
        %v867 = vadd.f32 %v835, 1.0
        %v868 = vadd.f32 %v836, 1.0
        %v869 = vadd.f32 %v837, 1.0
        %v870 = vadd.f32 %v838, 1.0
        %v871 = vadd.f32 %v839, 1.0
        %v872 = vadd.f32 %v840, 1.0
        %v873 = vadd.f32 %v841, 1.0
        %v874 = vadd.f32 %v842, 1.0
        %v875 = vadd.f32 %v843, 1.0
        %v876 = vadd.f32 %v844, 1.0
        %v877 = vadd.f32 %v845, 1.0
        %v878 = vadd.f32 %v846, 1.0
        %v879 = vadd.f32 %v847, 1.0
        %v880 = vadd.f32 %v848, 1.0
        %v881 = vadd.f32 %v849, 1.0
        %v882 = vadd.f32 %v850, 1.0
        %v883 = vadd.f32 %v851, 1.0
        %v884 = vadd.f32 %v852, 1.0
        %v885 = vadd.f32 %v853, 1.0
        %v886 = vadd.f32 %v854, 1.0
        %v887 = vadd.f32 %v855, 1.0
        %v888 = vadd.f32 %v856, 1.0
        %v889 = vadd.f32 %v857, 1.0
        %v890 = vadd.f32 %v858, 1.0
        %v891 = vadd.f32 %v859, 1.0
        %v892 = vadd.f32 %v860, 1.0
        %v893 = vadd.f32 %v861, 1.0
        %v894 = vmul.f32 %v862, 0.5
        %v895 = vmul.f32 %v863, 0.5
        %v896 = vmul.f32 %v864, 0.5
        %v897 = vmul.f32 %v865, 0.5
        %v898 = vmul.f32 %v866, 0.5
        %v899 = vmul.f32 %v867, 0.5
        %v900 = vmul.f32 %v868, 0.5
        %v901 = vmul.f32 %v869, 0.5
        %v902 = vmul.f32 %v870, 0.5
        %v903 = vmul.f32 %v871, 0.5
        %v904 = vmul.f32 %v872, 0.5
        %v905 = vmul.f32 %v873, 0.5
        %v906 = vmul.f32 %v874, 0.5
        %v907 = vmul.f32 %v875, 0.5
        %v908 = vmul.f32 %v876, 0.5
        %v909 = vmul.f32 %v877, 0.5
        %v910 = vmul.f32 %v878, 0.5
        %v911 = vmul.f32 %v879, 0.5
        %v912 = vmul.f32 %v880, 0.5
        %v913 = vmul.f32 %v881, 0.5
        %v914 = vmul.f32 %v882, 0.5
        %v915 = vmul.f32 %v883, 0.5
        %v916 = vmul.f32 %v884, 0.5
        %v917 = vmul.f32 %v885, 0.5
        %v918 = vmul.f32 %v886, 0.5
        %v919 = vmul.f32 %v887, 0.5
        %v920 = vmul.f32 %v888, 0.5
        %v921 = vmul.f32 %v889, 0.5
        %v922 = vmul.f32 %v890, 0.5
        %v923 = vmul.f32 %v891, 0.5
        %v924 = vmul.f32 %v892, 0.5
        %v925 = vmul.f32 %v893, 0.5
        %v926 = vmul.f32 %v511, %v894
        %v927 = vmul.f32 %v513, %v895
        %v928 = vmul.f32 %v624, %v896
        %v929 = vmul.f32 %v626, %v897
        %v930 = vmul.f32 %v517, %v898
        %v931 = vmul.f32 %v519, %v899
        %v932 = vmul.f32 %v630, %v900
        %v933 = vmul.f32 %v632, %v901
        %v934 = vmul.f32 %v523, %v902
        %v935 = vmul.f32 %v525, %v903
        %v936 = vmul.f32 %v636, %v904
        %v937 = vmul.f32 %v638, %v905
        %v938 = vmul.f32 %v529, %v906
        %v939 = vmul.f32 %v531, %v907
        %v940 = vmul.f32 %v642, %v908
        %v941 = vmul.f32 %v644, %v909
        %v942 = vmul.f32 %v535, %v910
        %v943 = vmul.f32 %v537, %v911
        %v944 = vmul.f32 %v648, %v912
        %v945 = vmul.f32 %v650, %v913
        %v946 = vmul.f32 %v541, %v914
        %v947 = vmul.f32 %v543, %v915
        %v948 = vmul.f32 %v654, %v916
        %v949 = vmul.f32 %v656, %v917
        %v950 = vmul.f32 %v547, %v918
        %v951 = vmul.f32 %v549, %v919
        %v952 = vmul.f32 %v660, %v920
        %v953 = vmul.f32 %v662, %v921
        %v954 = vmul.f32 %v553, %v922
        %v955 = vmul.f32 %v555, %v923
        %v956 = vmul.f32 %v666, %v924
        %v957 = vmul.f32 %v668, %v925
        %v958 = vld [vmem:[#allocation2] sm:$0xff]
        %v959 = vld [vmem:[#allocation2 + $0x8] sm:$0xff]
        %v960 = vld [vmem:[#allocation2 + $0x10] sm:$0xff]
        %v961 = vld [vmem:[#allocation2 + $0x18] sm:$0xff]
        %v962 = vld [vmem:[#allocation2 + $0x20] sm:$0xff]
        %v963 = vld [vmem:[#allocation2 + $0x28] sm:$0xff]
        %v964 = vld [vmem:[#allocation2 + $0x30] sm:$0xff]
        %v965 = vld [vmem:[#allocation2 + $0x38] sm:$0xff]
        %v966 = vld [vmem:[#allocation9] sm:$0xff]
        %v967 = vld [vmem:[#allocation9 + $0x8] sm:$0xff]
        %v968 = vld [vmem:[#allocation9 + $0x10] sm:$0xff]
        %v969 = vld [vmem:[#allocation9 + $0x18] sm:$0xff]
        %v970 = vld [vmem:[#allocation9 + $0x20] sm:$0xff]
        %v971 = vld [vmem:[#allocation9 + $0x28] sm:$0xff]
        %v972 = vld [vmem:[#allocation9 + $0x30] sm:$0xff]
        %v973 = vld [vmem:[#allocation9 + $0x38] sm:$0xff]
        %v974 = vld [vmem:[#allocation9 + $0x40] sm:$0xff]
        %v975 = vld [vmem:[#allocation9 + $0x48] sm:$0xff]
        %v976 = vld [vmem:[#allocation9 + $0x50] sm:$0xff]
        %v977 = vld [vmem:[#allocation9 + $0x58] sm:$0xff]
        %v978 = vld [vmem:[#allocation9 + $0x60] sm:$0xff]
        %v979 = vld [vmem:[#allocation9 + $0x68] sm:$0xff]
        %v980 = vld [vmem:[#allocation9 + $0x70] sm:$0xff]
        %v981 = vld [vmem:[#allocation9 + $0x78] sm:$0xff]
        %v982 = vld [vmem:[#allocation9 + $0x80] sm:$0xff]
        %v983 = vld [vmem:[#allocation9 + $0x88] sm:$0xff]
        %v984 = vld [vmem:[#allocation9 + $0x90] sm:$0xff]
        %v985 = vld [vmem:[#allocation9 + $0x98] sm:$0xff]
        %v986 = vld [vmem:[#allocation9 + $0xa0] sm:$0xff]
        %v987 = vld [vmem:[#allocation9 + $0xa8] sm:$0xff]
        %v988 = vld [vmem:[#allocation9 + $0xb0] sm:$0xff]
        %v989 = vld [vmem:[#allocation9 + $0xb8] sm:$0xff]
        %v990 = vld [vmem:[#allocation9 + $0xc0] sm:$0xff]
        %v991 = vld [vmem:[#allocation9 + $0xc8] sm:$0xff]
        %v992 = vld [vmem:[#allocation9 + $0xd0] sm:$0xff]
        %v993 = vld [vmem:[#allocation9 + $0xd8] sm:$0xff]
        %v994 = vld [vmem:[#allocation9 + $0xe0] sm:$0xff]
        %v995 = vld [vmem:[#allocation9 + $0xe8] sm:$0xff]
        %v996 = vld [vmem:[#allocation9 + $0xf0] sm:$0xff]
        %v997 = vld [vmem:[#allocation9 + $0xf8] sm:$0xff]
        %v998 = vld [vmem:[#allocation9 + $0x100] sm:$0xff]
        %v999 = vld [vmem:[#allocation9 + $0x108] sm:$0xff]
        %v1000 = vld [vmem:[#allocation9 + $0x110] sm:$0xff]
        %v1001 = vld [vmem:[#allocation9 + $0x118] sm:$0xff]
        %v1002 = vld [vmem:[#allocation9 + $0x120] sm:$0xff]
        %v1003 = vld [vmem:[#allocation9 + $0x128] sm:$0xff]
        %v1004 = vld [vmem:[#allocation9 + $0x130] sm:$0xff]
        %v1005 = vld [vmem:[#allocation9 + $0x138] sm:$0xff]
        %v1006 = vld [vmem:[#allocation9 + $0x140] sm:$0xff]
        %v1007 = vld [vmem:[#allocation9 + $0x148] sm:$0xff]
        %v1008 = vld [vmem:[#allocation9 + $0x150] sm:$0xff]
        %v1009 = vld [vmem:[#allocation9 + $0x158] sm:$0xff]
        %v1010 = vld [vmem:[#allocation9 + $0x160] sm:$0xff]
        %v1011 = vld [vmem:[#allocation9 + $0x168] sm:$0xff]
        %v1012 = vld [vmem:[#allocation9 + $0x170] sm:$0xff]
        %v1013 = vld [vmem:[#allocation9 + $0x178] sm:$0xff]
        %v1014 = vld [vmem:[#allocation9 + $0x180] sm:$0xff]
        %v1015 = vld [vmem:[#allocation9 + $0x188] sm:$0xff]
        %v1016 = vld [vmem:[#allocation9 + $0x190] sm:$0xff]
        %v1017 = vld [vmem:[#allocation9 + $0x198] sm:$0xff]
        %v1018 = vld [vmem:[#allocation9 + $0x1a0] sm:$0xff]
        %v1019 = vld [vmem:[#allocation9 + $0x1a8] sm:$0xff]
        %v1020 = vld [vmem:[#allocation9 + $0x1b0] sm:$0xff]
        %v1021 = vld [vmem:[#allocation9 + $0x1b8] sm:$0xff]
        %v1022 = vld [vmem:[#allocation9 + $0x1c0] sm:$0xff]
        %v1023 = vld [vmem:[#allocation9 + $0x1c8] sm:$0xff]
        %v1024 = vld [vmem:[#allocation9 + $0x1d0] sm:$0xff]
        %v1025 = vld [vmem:[#allocation9 + $0x1d8] sm:$0xff]
        %v1026 = vld [vmem:[#allocation9 + $0x1e0] sm:$0xff]
        %v1027 = vld [vmem:[#allocation9 + $0x1e8] sm:$0xff]
        %v1028 = vld [vmem:[#allocation9 + $0x1f0] sm:$0xff]
        %v1029 = vld [vmem:[#allocation9 + $0x1f8] sm:$0xff]
        %1030 = vmatprep.subr.mxu0 0.0
        %1031 = vmatpush1.msra.mxu0 %v966
        %1032 = vmatprep.subr.mxu0 0.0
        %1033 = vmatpush1.msra.mxu0 %v967
        %1034 = vmatprep.subr.mxu0 0.0
        %1035 = vmatpush1.msra.mxu0 %v968
        %1036 = vmatprep.subr.mxu0 0.0
        %1037 = vmatpush1.msra.mxu0 %v969
        %1038 = vmatprep.subr.mxu0 0.0
        %1039 = vmatpush1.msra.mxu0 %v970
        %1040 = vmatprep.subr.mxu0 0.0
        %1041 = vmatpush1.msra.mxu0 %v971
        %1042 = vmatprep.subr.mxu0 0.0
        %1043 = vmatpush1.msra.mxu0 %v972
        %1044 = vmatprep.subr.mxu0 0.0
        %1045 = vmatpush1.msra.mxu0 %v973
        %1046 = vmatprep.subr.mxu0 0.0
        %1047 = vmatpush1.msra.mxu0 %v974
        %1048 = vmatprep.subr.mxu0 0.0
        %1049 = vmatpush1.msra.mxu0 %v975
        %1050 = vmatprep.subr.mxu0 0.0
        %1051 = vmatpush1.msra.mxu0 %v976
        %1052 = vmatprep.subr.mxu0 0.0
        %1053 = vmatpush1.msra.mxu0 %v977
        %1054 = vmatprep.subr.mxu0 0.0
        %1055 = vmatpush1.msra.mxu0 %v978
        %1056 = vmatprep.subr.mxu0 0.0
        %1057 = vmatpush1.msra.mxu0 %v979
        %1058 = vmatprep.subr.mxu0 0.0
        %1059 = vmatpush1.msra.mxu0 %v980
        %1060 = vmatprep.subr.mxu0 0.0
        %1061 = vmatpush1.msra.mxu0 %v981
        %1062 = vmatprep.subr.mxu0 0.0
        %1063 = vmatpush1.msra.mxu0 %v982
        %1064 = vmatprep.subr.mxu0 0.0
        %1065 = vmatpush1.msra.mxu0 %v983
        %1066 = vmatprep.subr.mxu0 0.0
        %1067 = vmatpush1.msra.mxu0 %v984
        %1068 = vmatprep.subr.mxu0 0.0
        %1069 = vmatpush1.msra.mxu0 %v985
        %1070 = vmatprep.subr.mxu0 0.0
        %1071 = vmatpush1.msra.mxu0 %v986
        %1072 = vmatprep.subr.mxu0 0.0
        %1073 = vmatpush1.msra.mxu0 %v987
        %1074 = vmatprep.subr.mxu0 0.0
        %1075 = vmatpush1.msra.mxu0 %v988
        %1076 = vmatprep.subr.mxu0 0.0
        %1077 = vmatpush1.msra.mxu0 %v989
        %1078 = vmatprep.subr.mxu0 0.0
        %1079 = vmatpush1.msra.mxu0 %v990
        %1080 = vmatprep.subr.mxu0 0.0
        %1081 = vmatpush1.msra.mxu0 %v991
        %1082 = vmatprep.subr.mxu0 0.0
        %1083 = vmatpush1.msra.mxu0 %v992
        %1084 = vmatprep.subr.mxu0 0.0
        %1085 = vmatpush1.msra.mxu0 %v993
        %1086 = vmatprep.subr.mxu0 0.0
        %1087 = vmatpush1.msra.mxu0 %v994
        %1088 = vmatprep.subr.mxu0 0.0
        %1089 = vmatpush1.msra.mxu0 %v995
        %1090 = vmatprep.subr.mxu0 0.0
        %1091 = vmatpush1.msra.mxu0 %v996
        %1092 = vmatprep.subr.mxu0 0.0
        %1093 = vmatpush1.msra.mxu0 %v997
        %1094 = vmatprep.mubr.f32.mxu0 %v927
        %1095 = vmatmul.mubr.f32.gmra.mrb[0].mxu0 %v926
        %v1096 = vpop.f32.mrb[0].mxu0
        %v1097 = vadd.f32 0.0, %v1096
        %v1098 = vpop.f32.mrb[0].mxu0
        %1099 = vmatprep.mubr.f32.mxu0 %v931
        %1100 = vmatmul.mubr.f32.gmra.mrb[0].mxu0 %v930
        %v1101 = vpop.f32.mrb[0].mxu0
        %v1102 = vadd.f32 0.0, %v1101
        %v1103 = vpop.f32.mrb[0].mxu0
        %1104 = vmatprep.mubr.f32.mxu0 %v935
        %1105 = vmatmul.mubr.f32.gmra.mrb[0].mxu0 %v934
        %v1106 = vpop.f32.mrb[0].mxu0
        %v1107 = vadd.f32 0.0, %v1106
        %v1108 = vpop.f32.mrb[0].mxu0
        %1109 = vmatprep.mubr.f32.mxu0 %v939
        %1110 = vmatmul.mubr.f32.gmra.mrb[0].mxu0 %v938
        %v1111 = vpop.f32.mrb[0].mxu0
        %v1112 = vadd.f32 0.0, %v1111
        %v1113 = vpop.f32.mrb[0].mxu0
        %1114 = vmatprep.mubr.f32.mxu0 %v943
        %1115 = vmatmul.mubr.f32.gmra.mrb[0].mxu0 %v942
        %v1116 = vpop.f32.mrb[0].mxu0
        %v1117 = vadd.f32 0.0, %v1116
        %v1118 = vpop.f32.mrb[0].mxu0
        %1119 = vmatprep.mubr.f32.mxu0 %v947
        %1120 = vmatmul.mubr.f32.gmra.mrb[0].mxu0 %v946
        %v1121 = vpop.f32.mrb[0].mxu0
        %v1122 = vadd.f32 0.0, %v1121
        %v1123 = vpop.f32.mrb[0].mxu0
        %1124 = vmatprep.mubr.f32.mxu0 %v951
        %1125 = vmatmul.mubr.f32.gmra.mrb[0].mxu0 %v950
        %v1126 = vpop.f32.mrb[0].mxu0
        %v1127 = vadd.f32 0.0, %v1126
        %v1128 = vpop.f32.mrb[0].mxu0
        %1129 = vmatprep.mubr.f32.mxu0 %v955
        %1130 = vmatmul.mubr.f32.gmra.mrb[0].mxu0 %v954
        %v1131 = vpop.f32.mrb[0].mxu0
        %v1132 = vadd.f32 0.0, %v1131
        %v1133 = vpop.f32.mrb[0].mxu0
        %1134 = vdwg.mxu0
        %1135 = vmatprep.subr.mxu0 0.0
        %1136 = vmatpush1.msra.mxu0 %v998
        %1137 = vmatprep.subr.mxu0 0.0
        %1138 = vmatpush1.msra.mxu0 %v999
        %1139 = vmatprep.subr.mxu0 0.0
        %1140 = vmatpush1.msra.mxu0 %v1000
        %1141 = vmatprep.subr.mxu0 0.0
        %1142 = vmatpush1.msra.mxu0 %v1001
        %1143 = vmatprep.subr.mxu0 0.0
        %1144 = vmatpush1.msra.mxu0 %v1002
        %1145 = vmatprep.subr.mxu0 0.0
        %1146 = vmatpush1.msra.mxu0 %v1003
        %1147 = vmatprep.subr.mxu0 0.0
        %1148 = vmatpush1.msra.mxu0 %v1004
        %1149 = vmatprep.subr.mxu0 0.0
        %1150 = vmatpush1.msra.mxu0 %v1005
        %1151 = vmatprep.subr.mxu0 0.0
        %1152 = vmatpush1.msra.mxu0 %v1006
        %1153 = vmatprep.subr.mxu0 0.0
        %1154 = vmatpush1.msra.mxu0 %v1007
        %1155 = vmatprep.subr.mxu0 0.0
        %1156 = vmatpush1.msra.mxu0 %v1008
        %1157 = vmatprep.subr.mxu0 0.0
        %1158 = vmatpush1.msra.mxu0 %v1009
        %1159 = vmatprep.subr.mxu0 0.0
        %1160 = vmatpush1.msra.mxu0 %v1010
        %1161 = vmatprep.subr.mxu0 0.0
        %1162 = vmatpush1.msra.mxu0 %v1011
        %1163 = vmatprep.subr.mxu0 0.0
        %1164 = vmatpush1.msra.mxu0 %v1012
        %1165 = vmatprep.subr.mxu0 0.0
        %1166 = vmatpush1.msra.mxu0 %v1013
        %1167 = vmatprep.subr.mxu0 0.0
        %1168 = vmatpush1.msra.mxu0 %v1014
        %1169 = vmatprep.subr.mxu0 0.0
        %1170 = vmatpush1.msra.mxu0 %v1015
        %1171 = vmatprep.subr.mxu0 0.0
        %1172 = vmatpush1.msra.mxu0 %v1016
        %1173 = vmatprep.subr.mxu0 0.0
        %1174 = vmatpush1.msra.mxu0 %v1017
        %1175 = vmatprep.subr.mxu0 0.0
        %1176 = vmatpush1.msra.mxu0 %v1018
        %1177 = vmatprep.subr.mxu0 0.0
        %1178 = vmatpush1.msra.mxu0 %v1019
        %1179 = vmatprep.subr.mxu0 0.0
        %1180 = vmatpush1.msra.mxu0 %v1020
        %1181 = vmatprep.subr.mxu0 0.0
        %1182 = vmatpush1.msra.mxu0 %v1021
        %1183 = vmatprep.subr.mxu0 0.0
        %1184 = vmatpush1.msra.mxu0 %v1022
        %1185 = vmatprep.subr.mxu0 0.0
        %1186 = vmatpush1.msra.mxu0 %v1023
        %1187 = vmatprep.subr.mxu0 0.0
        %1188 = vmatpush1.msra.mxu0 %v1024
        %1189 = vmatprep.subr.mxu0 0.0
        %1190 = vmatpush1.msra.mxu0 %v1025
        %1191 = vmatprep.subr.mxu0 0.0
        %1192 = vmatpush1.msra.mxu0 %v1026
        %1193 = vmatprep.subr.mxu0 0.0
        %1194 = vmatpush1.msra.mxu0 %v1027
        %1195 = vmatprep.subr.mxu0 0.0
        %1196 = vmatpush1.msra.mxu0 %v1028
        %1197 = vmatprep.subr.mxu0 0.0
        %1198 = vmatpush1.msra.mxu0 %v1029
        %1199 = vmatprep.mubr.f32.mxu0 %v929
        %1200 = vmatmul.mubr.f32.gmra.mrb[0].mxu0 %v928
        %v1201 = vpop.f32.mrb[0].mxu0
        %v1202 = vadd.f32 %v1097, %v1201
        %v1203 = vpop.f32.mrb[0].mxu0
        %1204 = vmatprep.mubr.f32.mxu0 %v933
        %1205 = vmatmul.mubr.f32.gmra.mrb[0].mxu0 %v932
        %v1206 = vpop.f32.mrb[0].mxu0
        %v1207 = vadd.f32 %v1102, %v1206
        %v1208 = vpop.f32.mrb[0].mxu0
        %1209 = vmatprep.mubr.f32.mxu0 %v937
        %1210 = vmatmul.mubr.f32.gmra.mrb[0].mxu0 %v936
        %v1211 = vpop.f32.mrb[0].mxu0
        %v1212 = vadd.f32 %v1107, %v1211
        %v1213 = vpop.f32.mrb[0].mxu0
        %1214 = vmatprep.mubr.f32.mxu0 %v941
        %1215 = vmatmul.mubr.f32.gmra.mrb[0].mxu0 %v940
        %v1216 = vpop.f32.mrb[0].mxu0
        %v1217 = vadd.f32 %v1112, %v1216
        %v1218 = vpop.f32.mrb[0].mxu0
        %1219 = vmatprep.mubr.f32.mxu0 %v945
        %1220 = vmatmul.mubr.f32.gmra.mrb[0].mxu0 %v944
        %v1221 = vpop.f32.mrb[0].mxu0
        %v1222 = vadd.f32 %v1117, %v1221
        %v1223 = vpop.f32.mrb[0].mxu0
        %1224 = vmatprep.mubr.f32.mxu0 %v949
        %1225 = vmatmul.mubr.f32.gmra.mrb[0].mxu0 %v948
        %v1226 = vpop.f32.mrb[0].mxu0
        %v1227 = vadd.f32 %v1122, %v1226
        %v1228 = vpop.f32.mrb[0].mxu0
        %1229 = vmatprep.mubr.f32.mxu0 %v953
        %1230 = vmatmul.mubr.f32.gmra.mrb[0].mxu0 %v952
        %v1231 = vpop.f32.mrb[0].mxu0
        %v1232 = vadd.f32 %v1127, %v1231
        %v1233 = vpop.f32.mrb[0].mxu0
        %1234 = vmatprep.mubr.f32.mxu0 %v957
        %1235 = vmatmul.mubr.f32.gmra.mrb[0].mxu0 %v956
        %v1236 = vpop.f32.mrb[0].mxu0
        %v1237 = vadd.f32 %v1132, %v1236
        %v1238 = vpop.f32.mrb[0].mxu0
        %1239 = vdwg.mxu0
        %v1240 = vadd.f32 %v958, %v1202
        %v1241 = vadd.f32 %v959, %v1207
        %v1242 = vadd.f32 %v960, %v1212
        %v1243 = vadd.f32 %v961, %v1217
        %v1244 = vadd.f32 %v962, %v1222
        %v1245 = vadd.f32 %v963, %v1227
        %v1246 = vadd.f32 %v964, %v1232
        %v1247 = vadd.f32 %v965, %v1237
        %1248 = vst [vmem:[#allocation2] sm:$0xff] %v1240
        %1249 = vst [vmem:[#allocation2 + $0x8] sm:$0xff] %v1241
        %1250 = vst [vmem:[#allocation2 + $0x10] sm:$0xff] %v1242
        %1251 = vst [vmem:[#allocation2 + $0x18] sm:$0xff] %v1243
        %1252 = vst [vmem:[#allocation2 + $0x20] sm:$0xff] %v1244
        %1253 = vst [vmem:[#allocation2 + $0x28] sm:$0xff] %v1245
        %1254 = vst [vmem:[#allocation2 + $0x30] sm:$0xff] %v1246
        %1255 = vst [vmem:[#allocation2 + $0x38] sm:$0xff] %v1247
        // Predicated region
        $region65: #{tpu_custom_call.1} parent=39 // pred_check
          %p1256 = pneg %p338
        $region66: #{tpu_custom_call.1} parent=39 // pred_check_branch
          %1258 = sbr.rel (%p1256) target = $region68
        $region67: #{tpu_custom_call.1} parent=39 // pred_region
          %v1259 = vld [vmem:[#allocation2] sm:$0xff]
          %v1260 = vld [vmem:[#allocation2 + $0x8] sm:$0xff]
          %v1261 = vld [vmem:[#allocation2 + $0x10] sm:$0xff]
          %v1262 = vld [vmem:[#allocation2 + $0x18] sm:$0xff]
          %v1263 = vld [vmem:[#allocation2 + $0x20] sm:$0xff]
          %v1264 = vld [vmem:[#allocation2 + $0x28] sm:$0xff]
          %v1265 = vld [vmem:[#allocation2 + $0x30] sm:$0xff]
          %v1266 = vld [vmem:[#allocation2 + $0x38] sm:$0xff]
          %v1267 = vld [vmem:[#allocation11] sm:$0x1]
          %v1269 = vlaneseq
          %v1270 = vshrl.u32 %v1269, 7
          %v1271 = vsub.s32 0, %v1270
          %v1272 = vrot.slane %v1267, %v1271
          %v1274 = vadd.f32 %v1259, %v1272
          %v1275 = vadd.f32 %v1260, %v1272
          %v1276 = vadd.f32 %v1261, %v1272
          %v1277 = vadd.f32 %v1262, %v1272
          %v1278 = vadd.f32 %v1263, %v1272
          %v1279 = vadd.f32 %v1264, %v1272
          %v1280 = vadd.f32 %v1265, %v1272
          %v1281 = vadd.f32 %v1266, %v1272
          %1282 = vst [vmem:[%s332] sm:$0xff] %v1274
          %1283 = vst [vmem:[%s332 + $0x8] sm:$0xff] %v1275
          %1284 = vst [vmem:[%s332 + $0x10] sm:$0xff] %v1276
          %1285 = vst [vmem:[%s332 + $0x18] sm:$0xff] %v1277
          %1286 = vst [vmem:[%s332 + $0x20] sm:$0xff] %v1278
          %1287 = vst [vmem:[%s332 + $0x28] sm:$0xff] %v1279
          %1288 = vst [vmem:[%s332 + $0x30] sm:$0xff] %v1280
          %1289 = vst [vmem:[%s332 + $0x38] sm:$0xff] %v1281
        $region68: #{tpu_custom_call.1} parent=39 // pred_fallthru
          _
        %s1290 = sand.u32 %s169, 1
        %s1291 = scalar_lea.sflag [#allocation5], %s1290
        %s1292 = sand.u32 %s169, 1
        %s1293 = smul.addr %s1292, 64
        %s1294 = scalar_lea.vmem [#allocation12], %s1293
        // Predicated region
        $region69: #{tpu_custom_call.1} parent=39 // pred_check
          %p1295 = pneg %p179
        $region70: #{tpu_custom_call.1} parent=39 // pred_check_branch
          %1297 = sbr.rel (%p1295) target = $region72
        $region71: #{tpu_custom_call.1} parent=39 // pred_region
          %s1298 = smul.u32 8, %s28
          %s1300 = ssub.s32 1024, 1024
          %1301 = vsyncadd %s1291, %s1300
          %s1302 = smul.addr %s1298, 128
          %s1303 = scalar_lea.hbm %s5, %s1302
          %s1304 = sshll.u32 %s1294, 4
          %s1305 = int_to_ptr.vmem [resolvable:$true] %s1304
          %1310 = dma.vmem_to_hbm [thread:$0]  %s1305, 1024, %s1303, %s1291, 128, 128, 8
        $region72: #{tpu_custom_call.1} parent=39 // pred_fallthru
          _
      $region40: #{tpu_custom_call.1} parent=5 // pred_fallthru
        _
      %p1311 = scmp.le.s32.totalorder 2, %s19
      // Predicated region
      $region73: #{tpu_custom_call.1} parent=5 // pred_check
        %p1312 = pneg %p1311
      $region74: #{tpu_custom_call.1} parent=5 // pred_check_branch
        %1314 = sbr.rel (%p1312) target = $region76
      $region75: #{tpu_custom_call.1} parent=5 // pred_region
        %s1315 = ssub.s32 %s19, 2
        // Predicated region
        $region77: #{tpu_custom_call.1} parent=75 // pred_check
          %p1316 = pneg %p185
        $region78: #{tpu_custom_call.1} parent=75 // pred_check_branch
          %1318 = sbr.rel (%p1316) target = $region80
        $region79: #{tpu_custom_call.1} parent=75 // pred_region
          %s1319 = sand.u32 %s170, 1
          %s1320 = scalar_lea.sflag [#allocation5], %s1319
          %s1321 = sand.u32 %s170, 1
          %s1322 = smul.addr %s1321, 64
          %s1323 = scalar_lea.vmem [#allocation12], %s1322
          %1324 = dma.done %s1320, 1024
        $region80: #{tpu_custom_call.1} parent=75 // pred_fallthru
          _
      $region76: #{tpu_custom_call.1} parent=5 // pred_fallthru
        _
    $region6: #{tpu_custom_call.1} parent=1 // loop_footer
      %s23 = sadd.s32 1, %s19
    $region7: #{tpu_custom_call.1} parent=1 // loop_footer_branch
      %18 = sbr.rel target = $region3
    $region8: #{tpu_custom_call.1} parent=1 // loop_exit
      _
    %1325 = vsyncpa [#allocation4], 1
    %s1326 = scalar_lea.sflag [#allocation4], 1
    %1327 = vsyncpa %s1326, 1
    %1328 = vsyncpa [#allocation7], 1
    %1329 = vsyncpa [#allocation10], 1
    %1330 = vsyncpa [#allocation5], 1
    %s1331 = scalar_lea.sflag [#allocation5], 1
    %1332 = vsyncpa %s1331, 1

// kernel: tpu_custom_call.1
$region0: #{tpu_custom_call.1}
  #allocation0 [shape = 'u32[]', space=smem, size = 0x4, offset = 0x4, fixed_abs, tag = 'smem constant byte address 0x4 - core index']
  #allocation1 [shape = 'u32[144,128]{1,0:T(1,128)}', space=vmem, size = 0x12000, scoped, tag = 'internal scratch']
  #allocation2 [shape = 'f32[64,128]{1,0:T(8,128)}', space=vmem, size = 0x8000, scoped, tag = 'scratch operand']
  %s0 = inlined_call_operand.hbm [shape: f32[128,128], index: 0, kind: input, shape index: {}]
  %s1 = inlined_call_operand.hbm [shape: f32[128,512], index: 1, kind: input, shape index: {}]
  %s2 = inlined_call_operand.hbm [shape: f32[1,512], index: 2, kind: input, shape index: {}]
  %s3 = inlined_call_operand.hbm [shape: f32[512,128], index: 3, kind: input, shape index: {}]
  %s4 = inlined_call_operand.hbm [shape: f32[1,128], index: 4, kind: input, shape index: {}]
  %s5 = inlined_call_operand.hbm [shape: f32[128,128], index: 5, kind: output, shape index: {}]
  %s6 = sld [smem:[#allocation0]]
  $region81: #{tpu_custom_call.1} parent=0
    _
  %s8 = ssub.s32 1, %s6
  %s9 = scalar_select 0, %s8, %s6
  $region1: #{tpu_custom_call.1} parent=0
    #allocation3 [shape = 'u8[65536]{0}', space=vmem, size = 0x10000, scoped, tag = 'input window, operand 0']
    #allocation4 [shape = 's32[2]{0}', space=sflag, size = 0x8, scoped, tag = 'scoped memory for tpu_custom_call.1']
    #allocation5 [shape = 's32[2]{0}', space=sflag, size = 0x8, scoped, tag = 'scoped memory for tpu_custom_call.1']
    #allocation6 [shape = 'u8[262144]{0}', space=vmem, size = 0x40000, scoped, tag = 'input window, operand 1, single buffered']
    #allocation7 [shape = 's32[1]{0}', space=sflag, size = 0x4, scoped, tag = 'scoped memory for tpu_custom_call.1']
    #allocation8 [shape = 'u8[2048]{0}', space=vmem, size = 0x800, scoped, tag = 'input window, operand 2, single buffered']
    #allocation9 [shape = 'u8[262144]{0}', space=vmem, size = 0x40000, scoped, tag = 'input window, operand 3, single buffered']
    #allocation10 [shape = 's32[1]{0}', space=sflag, size = 0x4, scoped, tag = 'scoped memory for tpu_custom_call.1']
    #allocation11 [shape = 'u8[512]{0}', space=vmem, size = 0x400, scoped, tag = 'input window, operand 4, single buffered']
    #allocation12 [shape = 'u8[65536]{0}', space=vmem, size = 0x10000, scoped, tag = 'output window, operand 0']
    %10 = vsyncpa [#allocation4], 0
    %s11 = scalar_lea.sflag [#allocation4], 1
    %12 = vsyncpa %s11, 0
    %13 = vsyncpa [#allocation7], 0
    %14 = vsyncpa [#allocation10], 0
    %15 = vsyncpa [#allocation5], 0
    %s16 = scalar_lea.sflag [#allocation5], 1
    %17 = vsyncpa %s16, 0
    loop: start=0, step=1, limit=4
    $region2: #{tpu_custom_call.1} parent=1 // loop_pre_header
      _
    $region3: #{tpu_custom_call.1} parent=1 // loop_header
      %s19 = sphi 0, %s23
      %p20 = scmp.ge.s32.totalorder %s19, 4
      %s26 = sphi 0, %s38
      %s27 = sphi 0, %s34
      %s28 = sphi 0, %s26
      %s29 = sphi 0, %s27
      %s30 = sphi 0, %s28
      %s31 = sphi 0, %s29
      %s41 = sphi 0, %s43
      %s44 = sphi 0, %s41
      %s45 = sphi 0, %s44
      %s61 = sphi 0, %s45
      %s67 = sphi 0, %s69
      %s70 = sphi 0, %s67
      %s71 = sphi 0, %s70
      %s87 = sphi 0, %s71
      %s93 = sphi 0, %s95
      %s96 = sphi 0, %s93
      %s97 = sphi 0, %s96
      %s113 = sphi 0, %s97
      %s119 = sphi 0, %s121
      %s122 = sphi 0, %s119
      %s123 = sphi 0, %s122
      %s139 = sphi 0, %s123
      %s143 = sphi 0, %s143
      %s145 = sphi 0, %s143
      %s146 = sphi 0, %s145
      %s160 = sphi 0, %s146
      %s166 = sphi 0, %s168
      %s169 = sphi 0, %s166
      %s170 = sphi 0, %s169
      %s186 = sphi 0, %s170
    $region4: #{tpu_custom_call.1} parent=1 // loop_header_branch
      %22 = sbr.rel (%p20) target = $region8
    $region5: #{tpu_custom_call.1} parent=1 // loop_body
      %s24 = ssub.s32 %s19, 1
      %s25 = ssub.s32 %s19, 2
      %s32 = sadd.s32 1, %s27
      %p33 = scmp.ge.s32.totalorder %s32, 1
      %s34 = scalar_select %p33, 0, %s32
      %s35 = sadd.s32 1, %s26
      %s36 = scalar_select %p33, %s35, %s26
      %p37 = scmp.ge.s32.totalorder %s36, 2
      %s38 = scalar_select %p37, 0, %s36
      %s39 = ssub.s32 %s26, %s38
      %p40 = scmp.eq.s32.totalorder %s39, 0
      %s42 = sadd.s32 %s41, 1
      %s43 = scalar_select %p40, %s41, %s42
      %p46 = pneg %p40
      %p47 = scmp.eq.s32.totalorder %s19, 1
      %p48 = por %p46, %p47
      %p49 = scmp.ne.s32.totalorder %s41, %s44
      %p50 = scmp.eq.s32.totalorder %s19, 0
      %p51 = por %p49, %p50
      %p52 = scmp.ne.s32.totalorder %s41, %s44
      %p53 = scmp.eq.s32.totalorder %s24, 1
      %p54 = por %p52, %p53
      %p55 = scmp.ne.s32.totalorder %s44, %s45
      %p56 = scmp.eq.s32.totalorder %s24, 0
      %p57 = por %p55, %p56
      %p58 = scmp.ne.s32.totalorder %s44, %s45
      %p59 = scmp.eq.s32.totalorder %s25, 1
      %p60 = por %p58, %p59
      %p62 = scmp.ne.s32.totalorder %s45, %s61
      %p63 = scmp.eq.s32.totalorder %s25, 0
      %p64 = por %p62, %p63
      %s65 = ssub.s32 %s27, %s34
      %p66 = scmp.eq.s32.totalorder %s65, 0
      %s68 = sadd.s32 %s67, 1
      %s69 = scalar_select %p66, %s67, %s68
      %p72 = pneg %p66
      %p73 = scmp.eq.s32.totalorder %s19, 1
      %p74 = por %p72, %p73
      %p75 = scmp.ne.s32.totalorder %s67, %s70
      %p76 = scmp.eq.s32.totalorder %s19, 0
      %p77 = por %p75, %p76
      %p78 = scmp.ne.s32.totalorder %s67, %s70
      %p79 = scmp.eq.s32.totalorder %s24, 1
      %p80 = por %p78, %p79
      %p81 = scmp.ne.s32.totalorder %s70, %s71
      %p82 = scmp.eq.s32.totalorder %s24, 0
      %p83 = por %p81, %p82
      %p84 = scmp.ne.s32.totalorder %s70, %s71
      %p85 = scmp.eq.s32.totalorder %s25, 1
      %p86 = por %p84, %p85
      %p88 = scmp.ne.s32.totalorder %s71, %s87
      %p89 = scmp.eq.s32.totalorder %s25, 0
      %p90 = por %p88, %p89
      %s91 = ssub.s32 %s27, %s34
      %p92 = scmp.eq.s32.totalorder %s91, 0
      %s94 = sadd.s32 %s93, 1
      %s95 = scalar_select %p92, %s93, %s94
      %p98 = pneg %p92
      %p99 = scmp.eq.s32.totalorder %s19, 1
      %p100 = por %p98, %p99
      %p101 = scmp.ne.s32.totalorder %s93, %s96
      %p102 = scmp.eq.s32.totalorder %s19, 0
      %p103 = por %p101, %p102
      %p104 = scmp.ne.s32.totalorder %s93, %s96
      %p105 = scmp.eq.s32.totalorder %s24, 1
      %p106 = por %p104, %p105
      %p107 = scmp.ne.s32.totalorder %s96, %s97
      %p108 = scmp.eq.s32.totalorder %s24, 0
      %p109 = por %p107, %p108
      %p110 = scmp.ne.s32.totalorder %s96, %s97
      %p111 = scmp.eq.s32.totalorder %s25, 1
      %p112 = por %p110, %p111
      %p114 = scmp.ne.s32.totalorder %s97, %s113
      %p115 = scmp.eq.s32.totalorder %s25, 0
      %p116 = por %p114, %p115
      %s117 = ssub.s32 %s27, %s34
      %p118 = scmp.eq.s32.totalorder %s117, 0
      %s120 = sadd.s32 %s119, 1
      %s121 = scalar_select %p118, %s119, %s120
      %p124 = pneg %p118
      %p125 = scmp.eq.s32.totalorder %s19, 1
      %p126 = por %p124, %p125
      %p127 = scmp.ne.s32.totalorder %s119, %s122
      %p128 = scmp.eq.s32.totalorder %s19, 0
      %p129 = por %p127, %p128
      %p130 = scmp.ne.s32.totalorder %s119, %s122
      %p131 = scmp.eq.s32.totalorder %s24, 1
      %p132 = por %p130, %p131
      %p133 = scmp.ne.s32.totalorder %s122, %s123
      %p134 = scmp.eq.s32.totalorder %s24, 0
      %p135 = por %p133, %p134
      %p136 = scmp.ne.s32.totalorder %s122, %s123
      %p137 = scmp.eq.s32.totalorder %s25, 1
      %p138 = por %p136, %p137
      %p140 = scmp.ne.s32.totalorder %s123, %s139
      %p141 = scmp.eq.s32.totalorder %s25, 0
      %p142 = por %p140, %p141
      %s144 = sadd.s32 %s143, 1
      %p147 = scmp.eq.s32.totalorder %s19, 1
      %p148 = scmp.ne.s32.totalorder %s143, %s145
      %p149 = scmp.eq.s32.totalorder %s19, 0
      %p150 = por %p148, %p149
      %p151 = scmp.ne.s32.totalorder %s143, %s145
      %p152 = scmp.eq.s32.totalorder %s24, 1
      %p153 = por %p151, %p152
      %p154 = scmp.ne.s32.totalorder %s145, %s146
      %p155 = scmp.eq.s32.totalorder %s24, 0
      %p156 = por %p154, %p155
      %p157 = scmp.ne.s32.totalorder %s145, %s146
      %p158 = scmp.eq.s32.totalorder %s25, 1
      %p159 = por %p157, %p158
      %p161 = scmp.ne.s32.totalorder %s146, %s160
      %p162 = scmp.eq.s32.totalorder %s25, 0
      %p163 = por %p161, %p162
      %s164 = ssub.s32 %s26, %s38
      %p165 = scmp.eq.s32.totalorder %s164, 0
      %s167 = sadd.s32 %s166, 1
      %s168 = scalar_select %p165, %s166, %s167
      %p171 = pneg %p165
      %p172 = scmp.eq.s32.totalorder %s19, 1
      %p173 = por %p171, %p172
      %p174 = scmp.ne.s32.totalorder %s166, %s169
      %p175 = scmp.eq.s32.totalorder %s19, 0
      %p176 = por %p174, %p175
      %p177 = scmp.ne.s32.totalorder %s166, %s169
      %p178 = scmp.eq.s32.totalorder %s24, 1
      %p179 = por %p177, %p178
      %p180 = scmp.ne.s32.totalorder %s169, %s170
      %p181 = scmp.eq.s32.totalorder %s24, 0
      %p182 = por %p180, %p181
      %p183 = scmp.ne.s32.totalorder %s169, %s170
      %p184 = scmp.eq.s32.totalorder %s25, 1
      %p185 = por %p183, %p184
      %p187 = scmp.ne.s32.totalorder %s170, %s186
      %p188 = scmp.eq.s32.totalorder %s25, 0
      %p189 = por %p187, %p188
      %p190 = scmp.le.s32.totalorder 1, %s19
      %p191 = scmp.lt.s32.totalorder %s19, 3
      %p192 = pnand %p190, %p191
      %p193 = pneg %p192
      // Predicated region
      $region9: #{tpu_custom_call.1} parent=5 // pred_check
        _
      $region10: #{tpu_custom_call.1} parent=5 // pred_check_branch
        %195 = sbr.rel (%p192) target = $region12
      $region11: #{tpu_custom_call.1} parent=5 // pred_region
        %s196 = ssub.s32 %s19, 1
        // Predicated region
        $region13: #{tpu_custom_call.1} parent=11 // pred_check
          %p197 = pneg %p83
        $region14: #{tpu_custom_call.1} parent=11 // pred_check_branch
          %199 = sbr.rel (%p197) target = $region16
        $region15: #{tpu_custom_call.1} parent=11 // pred_region
          %s200 = smul.u32 4, %s29
          %s202 = ssub.s32 8192, 8192
          %203 = vsyncadd [#allocation7], %s202
          %s204 = smul.addr %s200, 128
          %s205 = scalar_lea.hbm %s1, %s204
          %s206 = sshll.u32 [#allocation6], 4
          %s207 = int_to_ptr.vmem [resolvable:$true] %s206
          %212 = dma.hbm_to_vmem [thread:$0]  %s205, 8192, %s207, [#allocation7], 512, 512, 32
        $region16: #{tpu_custom_call.1} parent=11 // pred_fallthru
          _
        // Predicated region
        $region17: #{tpu_custom_call.1} parent=11 // pred_check
          %p213 = pneg %p109
        $region18: #{tpu_custom_call.1} parent=11 // pred_check_branch
          %215 = sbr.rel (%p213) target = $region20
        $region19: #{tpu_custom_call.1} parent=11 // pred_region
          %s216 = smul.u32 4, %s29
          %s218 = ssub.s32 64, 64
          %219 = vsyncadd [#allocation7], %s218
          %s220 = smul.addr %s216, 16
          %s221 = scalar_lea.hbm %s2, %s220
          %s223 = sshll.u32 [#allocation8], 4
          %s224 = int_to_ptr.vmem [resolvable:$true] %s223
          %226 = dma.hbm_to_vmem [thread:$0]  %s221, 64, %s224, [#allocation7]
        $region20: #{tpu_custom_call.1} parent=11 // pred_fallthru
          _
        // Predicated region
        $region21: #{tpu_custom_call.1} parent=11 // pred_check
          %p227 = pneg %p135
        $region22: #{tpu_custom_call.1} parent=11 // pred_check_branch
          %229 = sbr.rel (%p227) target = $region24
        $region23: #{tpu_custom_call.1} parent=11 // pred_region
          %s230 = smul.u32 64, %s29
          %s232 = ssub.s32 8192, 8192
          %233 = vsyncadd [#allocation10], %s232
          %s234 = smul.addr %s230, 128
          %s235 = scalar_lea.hbm %s3, %s234
          %s236 = sshll.u32 [#allocation9], 4
          %s237 = int_to_ptr.vmem [resolvable:$true] %s236
          %242 = dma.hbm_to_vmem [thread:$0]  %s235, 8192, %s237, [#allocation10], 128, 128, 8
        $region24: #{tpu_custom_call.1} parent=11 // pred_fallthru
          _
        // Predicated region
        $region25: #{tpu_custom_call.1} parent=11 // pred_check
          %p243 = pneg %p156
        $region26: #{tpu_custom_call.1} parent=11 // pred_check_branch
          %245 = sbr.rel (%p243) target = $region28
        $region27: #{tpu_custom_call.1} parent=11 // pred_region
          %s247 = ssub.s32 16, 16
          %248 = vsyncadd [#allocation10], %s247
          %s250 = sshll.u32 [#allocation11], 4
          %s251 = int_to_ptr.vmem [resolvable:$true] %s250
          %253 = dma.hbm_to_vmem [thread:$0]  %s4, 16, %s251, [#allocation10]
        $region28: #{tpu_custom_call.1} parent=11 // pred_fallthru
          _
      $region12: #{tpu_custom_call.1} parent=5 // pred_fallthru
        _
      %p254 = scmp.lt.s32.totalorder %s19, 2
      // Predicated region
      $region29: #{tpu_custom_call.1} parent=5 // pred_check
        %p255 = pneg %p254
      $region30: #{tpu_custom_call.1} parent=5 // pred_check_branch
        %257 = sbr.rel (%p255) target = $region32
      $region31: #{tpu_custom_call.1} parent=5 // pred_region
        // Predicated region
        $region33: #{tpu_custom_call.1} parent=31 // pred_check
          %p258 = pneg %p51
        $region34: #{tpu_custom_call.1} parent=31 // pred_check_branch
          %260 = sbr.rel (%p258) target = $region36
        $region35: #{tpu_custom_call.1} parent=31 // pred_region
          %s261 = sand.u32 %s41, 1
          %s262 = scalar_lea.sflag [#allocation4], %s261
          %s263 = sand.u32 %s41, 1
          %s264 = smul.addr %s263, 64
          %s265 = scalar_lea.vmem [#allocation3], %s264
          %s266 = smul.u32 8, %s26
          %s268 = ssub.s32 1024, 1024
          %269 = vsyncadd %s262, %s268
          %s270 = smul.addr %s266, 128
          %s271 = scalar_lea.hbm %s0, %s270
          %s272 = sshll.u32 %s265, 4
          %s273 = int_to_ptr.vmem [resolvable:$true] %s272
          %278 = dma.hbm_to_vmem [thread:$0]  %s271, 1024, %s273, %s262, 128, 128, 8
        $region36: #{tpu_custom_call.1} parent=31 // pred_fallthru
          _
      $region32: #{tpu_custom_call.1} parent=5 // pred_fallthru
        _
      %p279 = scmp.le.s32.totalorder 1, %s19
      %p280 = scmp.lt.s32.totalorder %s19, 3
      %p281 = pnand %p279, %p280
      %p282 = pneg %p281
      // Predicated region
      $region37: #{tpu_custom_call.1} parent=5 // pred_check
        _
      $region38: #{tpu_custom_call.1} parent=5 // pred_check_branch
        %284 = sbr.rel (%p281) target = $region40
      $region39: #{tpu_custom_call.1} parent=5 // pred_region
        %s285 = ssub.s32 %s19, 1
        %s286 = sand.u32 %s44, 1
        %s287 = scalar_lea.sflag [#allocation4], %s286
        %s288 = sand.u32 %s44, 1
        %s289 = smul.addr %s288, 64
        %s290 = scalar_lea.vmem [#allocation3], %s289
        // Predicated region
        $region41: #{tpu_custom_call.1} parent=39 // pred_check
          %p291 = pneg %p57
        $region42: #{tpu_custom_call.1} parent=39 // pred_check_branch
          %293 = sbr.rel (%p291) target = $region44
        $region43: #{tpu_custom_call.1} parent=39 // pred_region
          %294 = dma.done %s287, 1024
        $region44: #{tpu_custom_call.1} parent=39 // pred_fallthru
          _
        // Predicated region
        $region45: #{tpu_custom_call.1} parent=39 // pred_check
          %p295 = pneg %p83
        $region46: #{tpu_custom_call.1} parent=39 // pred_check_branch
          %297 = sbr.rel (%p295) target = $region48
        $region47: #{tpu_custom_call.1} parent=39 // pred_region
          %298 = dma.done [#allocation7], 8192
        $region48: #{tpu_custom_call.1} parent=39 // pred_fallthru
          _
        // Predicated region
        $region49: #{tpu_custom_call.1} parent=39 // pred_check
          %p299 = pneg %p109
        $region50: #{tpu_custom_call.1} parent=39 // pred_check_branch
          %301 = sbr.rel (%p299) target = $region52
        $region51: #{tpu_custom_call.1} parent=39 // pred_region
          %302 = dma.done [#allocation7], 64
        $region52: #{tpu_custom_call.1} parent=39 // pred_fallthru
          _
        // Predicated region
        $region53: #{tpu_custom_call.1} parent=39 // pred_check
          %p303 = pneg %p135
        $region54: #{tpu_custom_call.1} parent=39 // pred_check_branch
          %305 = sbr.rel (%p303) target = $region56
        $region55: #{tpu_custom_call.1} parent=39 // pred_region
          %306 = dma.done [#allocation10], 8192
        $region56: #{tpu_custom_call.1} parent=39 // pred_fallthru
          _
        // Predicated region
        $region57: #{tpu_custom_call.1} parent=39 // pred_check
          %p307 = pneg %p156
        $region58: #{tpu_custom_call.1} parent=39 // pred_check_branch
          %309 = sbr.rel (%p307) target = $region60
        $region59: #{tpu_custom_call.1} parent=39 // pred_region
          %310 = dma.done [#allocation10], 16
        $region60: #{tpu_custom_call.1} parent=39 // pred_fallthru
          _
        %s311 = sand.u32 %s44, 1
        %s312 = scalar_lea.sflag [#allocation4], %s311
        %s313 = sand.u32 %s44, 1
        %s314 = smul.addr %s313, 64
        %s315 = scalar_lea.vmem [#allocation3], %s314
        %p316 = pneg %p57
        %p317 = pneg %p54
        %p318 = pneg %p83
        %p319 = pneg %p80
        %p320 = pneg %p109
        %p321 = pneg %p106
        %p322 = pneg %p135
        %p323 = pneg %p132
        %p324 = pneg %p156
        %p325 = pneg %p153
        %p326 = pneg %p182
        %p327 = pneg %p179
        %s328 = sand.u32 %s169, 1
        %s329 = scalar_lea.sflag [#allocation5], %s328
        %s330 = sand.u32 %s169, 1
        %s331 = smul.addr %s330, 64
        %s332 = scalar_lea.vmem [#allocation12], %s331
        %s333 = smul.u32 8, %s28
        %s334 = smul.u32 4, %s29
        %s335 = smul.u32 4, %s29
        %s336 = smul.u32 64, %s29
        %s337 = smul.u32 8, %s28
        %p338 = scmp.eq.s32.totalorder %s29, 0
        // Predicated region
        $region61: #{tpu_custom_call.1} parent=39 // pred_check
          %p339 = pneg %p338
        $region62: #{tpu_custom_call.1} parent=39 // pred_check_branch
          %341 = sbr.rel (%p339) target = $region64
        $region63: #{tpu_custom_call.1} parent=39 // pred_region
          %342 = vst [vmem:[#allocation2] sm:$0xff] 0.0
          %343 = vst [vmem:[#allocation2 + $0x8] sm:$0xff] 0.0
          %344 = vst [vmem:[#allocation2 + $0x10] sm:$0xff] 0.0
          %345 = vst [vmem:[#allocation2 + $0x18] sm:$0xff] 0.0
          %346 = vst [vmem:[#allocation2 + $0x20] sm:$0xff] 0.0
          %347 = vst [vmem:[#allocation2 + $0x28] sm:$0xff] 0.0
          %348 = vst [vmem:[#allocation2 + $0x30] sm:$0xff] 0.0
          %349 = vst [vmem:[#allocation2 + $0x38] sm:$0xff] 0.0
        $region64: #{tpu_custom_call.1} parent=39 // pred_fallthru
          _
        %v350 = vld [vmem:[%s290] sm:$0xff]
        %v351 = vld [vmem:[%s290 + $0x8] sm:$0xff]
        %v352 = vld [vmem:[%s290 + $0x10] sm:$0xff]
        %v353 = vld [vmem:[%s290 + $0x18] sm:$0xff]
        %v354 = vld [vmem:[%s290 + $0x20] sm:$0xff]
        %v355 = vld [vmem:[%s290 + $0x28] sm:$0xff]
        %v356 = vld [vmem:[%s290 + $0x30] sm:$0xff]
        %v357 = vld [vmem:[%s290 + $0x38] sm:$0xff]
        %v358 = vld [vmem:[#allocation6] sm:$0xff]
        %v359 = vld [vmem:[#allocation6 + $0x8] sm:$0xff]
        %v360 = vld [vmem:[#allocation6 + $0x10] sm:$0xff]
        %v361 = vld [vmem:[#allocation6 + $0x18] sm:$0xff]
        %v362 = vld [vmem:[#allocation6 + $0x20] sm:$0xff]
        %v363 = vld [vmem:[#allocation6 + $0x28] sm:$0xff]
        %v364 = vld [vmem:[#allocation6 + $0x30] sm:$0xff]
        %v365 = vld [vmem:[#allocation6 + $0x38] sm:$0xff]
        %v366 = vld [vmem:[#allocation6 + $0x40] sm:$0xff]
        %v367 = vld [vmem:[#allocation6 + $0x48] sm:$0xff]
        %v368 = vld [vmem:[#allocation6 + $0x50] sm:$0xff]
        %v369 = vld [vmem:[#allocation6 + $0x58] sm:$0xff]
        %v370 = vld [vmem:[#allocation6 + $0x60] sm:$0xff]
        %v371 = vld [vmem:[#allocation6 + $0x68] sm:$0xff]
        %v372 = vld [vmem:[#allocation6 + $0x70] sm:$0xff]
        %v373 = vld [vmem:[#allocation6 + $0x78] sm:$0xff]
        %v374 = vld [vmem:[#allocation6 + $0x80] sm:$0xff]
        %v375 = vld [vmem:[#allocation6 + $0x88] sm:$0xff]
        %v376 = vld [vmem:[#allocation6 + $0x90] sm:$0xff]
        %v377 = vld [vmem:[#allocation6 + $0x98] sm:$0xff]
        %v378 = vld [vmem:[#allocation6 + $0xa0] sm:$0xff]
        %v379 = vld [vmem:[#allocation6 + $0xa8] sm:$0xff]
        %v380 = vld [vmem:[#allocation6 + $0xb0] sm:$0xff]
        %v381 = vld [vmem:[#allocation6 + $0xb8] sm:$0xff]
        %v382 = vld [vmem:[#allocation6 + $0xc0] sm:$0xff]
        %v383 = vld [vmem:[#allocation6 + $0xc8] sm:$0xff]
        %v384 = vld [vmem:[#allocation6 + $0xd0] sm:$0xff]
        %v385 = vld [vmem:[#allocation6 + $0xd8] sm:$0xff]
        %v386 = vld [vmem:[#allocation6 + $0xe0] sm:$0xff]
        %v387 = vld [vmem:[#allocation6 + $0xe8] sm:$0xff]
        %v388 = vld [vmem:[#allocation6 + $0xf0] sm:$0xff]
        %v389 = vld [vmem:[#allocation6 + $0xf8] sm:$0xff]
        %v390 = vld [vmem:[#allocation6 + $0x100] sm:$0xff]
        %v391 = vld [vmem:[#allocation6 + $0x108] sm:$0xff]
        %v392 = vld [vmem:[#allocation6 + $0x110] sm:$0xff]
        %v393 = vld [vmem:[#allocation6 + $0x118] sm:$0xff]
        %v394 = vld [vmem:[#allocation6 + $0x120] sm:$0xff]
        %v395 = vld [vmem:[#allocation6 + $0x128] sm:$0xff]
        %v396 = vld [vmem:[#allocation6 + $0x130] sm:$0xff]
        %v397 = vld [vmem:[#allocation6 + $0x138] sm:$0xff]
        %v398 = vld [vmem:[#allocation6 + $0x140] sm:$0xff]
        %v399 = vld [vmem:[#allocation6 + $0x148] sm:$0xff]
        %v400 = vld [vmem:[#allocation6 + $0x150] sm:$0xff]
        %v401 = vld [vmem:[#allocation6 + $0x158] sm:$0xff]
        %v402 = vld [vmem:[#allocation6 + $0x160] sm:$0xff]
        %v403 = vld [vmem:[#allocation6 + $0x168] sm:$0xff]
        %v404 = vld [vmem:[#allocation6 + $0x170] sm:$0xff]
        %v405 = vld [vmem:[#allocation6 + $0x178] sm:$0xff]
        %v406 = vld [vmem:[#allocation6 + $0x180] sm:$0xff]
        %v407 = vld [vmem:[#allocation6 + $0x188] sm:$0xff]
        %v408 = vld [vmem:[#allocation6 + $0x190] sm:$0xff]
        %v409 = vld [vmem:[#allocation6 + $0x198] sm:$0xff]
        %v410 = vld [vmem:[#allocation6 + $0x1a0] sm:$0xff]
        %v411 = vld [vmem:[#allocation6 + $0x1a8] sm:$0xff]
        %v412 = vld [vmem:[#allocation6 + $0x1b0] sm:$0xff]
        %v413 = vld [vmem:[#allocation6 + $0x1b8] sm:$0xff]
        %v414 = vld [vmem:[#allocation6 + $0x1c0] sm:$0xff]
        %v415 = vld [vmem:[#allocation6 + $0x1c8] sm:$0xff]
        %v416 = vld [vmem:[#allocation6 + $0x1d0] sm:$0xff]
        %v417 = vld [vmem:[#allocation6 + $0x1d8] sm:$0xff]
        %v418 = vld [vmem:[#allocation6 + $0x1e0] sm:$0xff]
        %v419 = vld [vmem:[#allocation6 + $0x1e8] sm:$0xff]
        %v420 = vld [vmem:[#allocation6 + $0x1f0] sm:$0xff]
        %v421 = vld [vmem:[#allocation6 + $0x1f8] sm:$0xff]
        %v422 = vld [vmem:[#allocation8] sm:$0xf]
        %v424 = vlaneseq
        %v425 = vshrl.u32 %v424, 7
        %v426 = vsub.s32 0, %v425
        %v427 = vrot.slane %v422, %v426
        %v428 = vlaneseq
        %v429 = vshrl.u32 %v428, 7
        %v430 = vsub.s32 1, %v429
        %v431 = vrot.slane %v422, %v430
        %v432 = vlaneseq
        %v433 = vshrl.u32 %v432, 7
        %v434 = vsub.s32 2, %v433
        %v435 = vrot.slane %v422, %v434
        %v436 = vlaneseq
        %v437 = vshrl.u32 %v436, 7
        %v438 = vsub.s32 3, %v437
        %v439 = vrot.slane %v422, %v438
        %444 = vmatprep.subr.mxu0 %v359
        %445 = vmatpush1.msra.mxu0 %v358
        %446 = vmatprep.subr.mxu0 %v363
        %447 = vmatpush1.msra.mxu0 %v362
        %448 = vmatprep.subr.mxu0 %v367
        %449 = vmatpush1.msra.mxu0 %v366
        %450 = vmatprep.subr.mxu0 %v371
        %451 = vmatpush1.msra.mxu0 %v370
        %452 = vmatprep.subr.mxu0 %v375
        %453 = vmatpush1.msra.mxu0 %v374
        %454 = vmatprep.subr.mxu0 %v379
        %455 = vmatpush1.msra.mxu0 %v378
        %456 = vmatprep.subr.mxu0 %v383
        %457 = vmatpush1.msra.mxu0 %v382
        %458 = vmatprep.subr.mxu0 %v387
        %459 = vmatpush1.msra.mxu0 %v386
        %460 = vmatprep.subr.mxu0 %v391
        %461 = vmatpush1.msra.mxu0 %v390
        %462 = vmatprep.subr.mxu0 %v395
        %463 = vmatpush1.msra.mxu0 %v394
        %464 = vmatprep.subr.mxu0 %v399
        %465 = vmatpush1.msra.mxu0 %v398
        %466 = vmatprep.subr.mxu0 %v403
        %467 = vmatpush1.msra.mxu0 %v402
        %468 = vmatprep.subr.mxu0 %v407
        %469 = vmatpush1.msra.mxu0 %v406
        %470 = vmatprep.subr.mxu0 %v411
        %471 = vmatpush1.msra.mxu0 %v410
        %472 = vmatprep.subr.mxu0 %v415
        %473 = vmatpush1.msra.mxu0 %v414
        %474 = vmatprep.subr.mxu0 %v419
        %475 = vmatpush1.msra.mxu0 %v418
        %476 = vmatprep.subr.mxu0 0.0
        %477 = vmatpush1.msra.mxu0 0.0
        %478 = vmatprep.subr.mxu0 0.0
        %479 = vmatpush1.msra.mxu0 0.0
        %480 = vmatprep.subr.mxu0 0.0
        %481 = vmatpush1.msra.mxu0 0.0
        %482 = vmatprep.subr.mxu0 0.0
        %483 = vmatpush1.msra.mxu0 0.0
        %484 = vmatprep.subr.mxu0 0.0
        %485 = vmatpush1.msra.mxu0 0.0
        %486 = vmatprep.subr.mxu0 0.0
        %487 = vmatpush1.msra.mxu0 0.0
        %488 = vmatprep.subr.mxu0 0.0
        %489 = vmatpush1.msra.mxu0 0.0
        %490 = vmatprep.subr.mxu0 0.0
        %491 = vmatpush1.msra.mxu0 0.0
        %492 = vmatprep.subr.mxu0 0.0
        %493 = vmatpush1.msra.mxu0 0.0
        %494 = vmatprep.subr.mxu0 0.0
        %495 = vmatpush1.msra.mxu0 0.0
        %496 = vmatprep.subr.mxu0 0.0
        %497 = vmatpush1.msra.mxu0 0.0
        %498 = vmatprep.subr.mxu0 0.0
        %499 = vmatpush1.msra.mxu0 0.0
        %500 = vmatprep.subr.mxu0 0.0
        %501 = vmatpush1.msra.mxu0 0.0
        %502 = vmatprep.subr.mxu0 0.0
        %503 = vmatpush1.msra.mxu0 0.0
        %504 = vmatprep.subr.mxu0 0.0
        %505 = vmatpush1.msra.mxu0 0.0
        %506 = vmatprep.subr.mxu0 0.0
        %507 = vmatpush1.msra.mxu0 0.0
        %508 = vmatprep.mubr.f32.mxu0 0.0
        %509 = vmatmul.mubr.f32.gmra.mrb[0].mxu0 %v350
        %v510 = vpop.f32.mrb[0].mxu0
        %v511 = vadd.f32 %v427, %v510
        %v512 = vpop.f32.mrb[0].mxu0
        %v513 = vadd.f32 %v431, %v512
        %514 = vmatprep.mubr.f32.mxu0 0.0
        %515 = vmatmul.mubr.f32.gmra.mrb[0].mxu0 %v351
        %v516 = vpop.f32.mrb[0].mxu0
        %v517 = vadd.f32 %v427, %v516
        %v518 = vpop.f32.mrb[0].mxu0
        %v519 = vadd.f32 %v431, %v518
        %520 = vmatprep.mubr.f32.mxu0 0.0
        %521 = vmatmul.mubr.f32.gmra.mrb[0].mxu0 %v352
        %v522 = vpop.f32.mrb[0].mxu0
        %v523 = vadd.f32 %v427, %v522
        %v524 = vpop.f32.mrb[0].mxu0
        %v525 = vadd.f32 %v431, %v524
        %526 = vmatprep.mubr.f32.mxu0 0.0
        %527 = vmatmul.mubr.f32.gmra.mrb[0].mxu0 %v353
        %v528 = vpop.f32.mrb[0].mxu0
        %v529 = vadd.f32 %v427, %v528
        %v530 = vpop.f32.mrb[0].mxu0
        %v531 = vadd.f32 %v431, %v530
        %532 = vmatprep.mubr.f32.mxu0 0.0
        %533 = vmatmul.mubr.f32.gmra.mrb[0].mxu0 %v354
        %v534 = vpop.f32.mrb[0].mxu0
        %v535 = vadd.f32 %v427, %v534
        %v536 = vpop.f32.mrb[0].mxu0
        %v537 = vadd.f32 %v431, %v536
        %538 = vmatprep.mubr.f32.mxu0 0.0
        %539 = vmatmul.mubr.f32.gmra.mrb[0].mxu0 %v355
        %v540 = vpop.f32.mrb[0].mxu0
        %v541 = vadd.f32 %v427, %v540
        %v542 = vpop.f32.mrb[0].mxu0
        %v543 = vadd.f32 %v431, %v542
        %544 = vmatprep.mubr.f32.mxu0 0.0
        %545 = vmatmul.mubr.f32.gmra.mrb[0].mxu0 %v356
        %v546 = vpop.f32.mrb[0].mxu0
        %v547 = vadd.f32 %v427, %v546
        %v548 = vpop.f32.mrb[0].mxu0
        %v549 = vadd.f32 %v431, %v548
        %550 = vmatprep.mubr.f32.mxu0 0.0
        %551 = vmatmul.mubr.f32.gmra.mrb[0].mxu0 %v357
        %v552 = vpop.f32.mrb[0].mxu0
        %v553 = vadd.f32 %v427, %v552
        %v554 = vpop.f32.mrb[0].mxu0
        %v555 = vadd.f32 %v431, %v554
        %556 = vdwg.mxu0
        %557 = vmatprep.subr.mxu0 %v361
        %558 = vmatpush1.msra.mxu0 %v360
        %559 = vmatprep.subr.mxu0 %v365
        %560 = vmatpush1.msra.mxu0 %v364
        %561 = vmatprep.subr.mxu0 %v369
        %562 = vmatpush1.msra.mxu0 %v368
        %563 = vmatprep.subr.mxu0 %v373
        %564 = vmatpush1.msra.mxu0 %v372
        %565 = vmatprep.subr.mxu0 %v377
        %566 = vmatpush1.msra.mxu0 %v376
        %567 = vmatprep.subr.mxu0 %v381
        %568 = vmatpush1.msra.mxu0 %v380
        %569 = vmatprep.subr.mxu0 %v385
        %570 = vmatpush1.msra.mxu0 %v384
        %571 = vmatprep.subr.mxu0 %v389
        %572 = vmatpush1.msra.mxu0 %v388
        %573 = vmatprep.subr.mxu0 %v393
        %574 = vmatpush1.msra.mxu0 %v392
        %575 = vmatprep.subr.mxu0 %v397
        %576 = vmatpush1.msra.mxu0 %v396
        %577 = vmatprep.subr.mxu0 %v401
        %578 = vmatpush1.msra.mxu0 %v400
        %579 = vmatprep.subr.mxu0 %v405
        %580 = vmatpush1.msra.mxu0 %v404
        %581 = vmatprep.subr.mxu0 %v409
        %582 = vmatpush1.msra.mxu0 %v408
        %583 = vmatprep.subr.mxu0 %v413
        %584 = vmatpush1.msra.mxu0 %v412
        %585 = vmatprep.subr.mxu0 %v417
        %586 = vmatpush1.msra.mxu0 %v416
        %587 = vmatprep.subr.mxu0 %v421
        %588 = vmatpush1.msra.mxu0 %v420
        %589 = vmatprep.subr.mxu0 0.0
        %590 = vmatpush1.msra.mxu0 0.0
        %591 = vmatprep.subr.mxu0 0.0
        %592 = vmatpush1.msra.mxu0 0.0
        %593 = vmatprep.subr.mxu0 0.0
        %594 = vmatpush1.msra.mxu0 0.0
        %595 = vmatprep.subr.mxu0 0.0
        %596 = vmatpush1.msra.mxu0 0.0
        %597 = vmatprep.subr.mxu0 0.0
        %598 = vmatpush1.msra.mxu0 0.0
        %599 = vmatprep.subr.mxu0 0.0
        %600 = vmatpush1.msra.mxu0 0.0
        %601 = vmatprep.subr.mxu0 0.0
        %602 = vmatpush1.msra.mxu0 0.0
        %603 = vmatprep.subr.mxu0 0.0
        %604 = vmatpush1.msra.mxu0 0.0
        %605 = vmatprep.subr.mxu0 0.0
        %606 = vmatpush1.msra.mxu0 0.0
        %607 = vmatprep.subr.mxu0 0.0
        %608 = vmatpush1.msra.mxu0 0.0
        %609 = vmatprep.subr.mxu0 0.0
        %610 = vmatpush1.msra.mxu0 0.0
        %611 = vmatprep.subr.mxu0 0.0
        %612 = vmatpush1.msra.mxu0 0.0
        %613 = vmatprep.subr.mxu0 0.0
        %614 = vmatpush1.msra.mxu0 0.0
        %615 = vmatprep.subr.mxu0 0.0
        %616 = vmatpush1.msra.mxu0 0.0
        %617 = vmatprep.subr.mxu0 0.0
        %618 = vmatpush1.msra.mxu0 0.0
        %619 = vmatprep.subr.mxu0 0.0
        %620 = vmatpush1.msra.mxu0 0.0
        %621 = vmatprep.mubr.f32.mxu0 0.0
        %622 = vmatmul.mubr.f32.gmra.mrb[0].mxu0 %v350
        %v623 = vpop.f32.mrb[0].mxu0
        %v624 = vadd.f32 %v435, %v623
        %v625 = vpop.f32.mrb[0].mxu0
        %v626 = vadd.f32 %v439, %v625
        %627 = vmatprep.mubr.f32.mxu0 0.0
        %628 = vmatmul.mubr.f32.gmra.mrb[0].mxu0 %v351
        %v629 = vpop.f32.mrb[0].mxu0
        %v630 = vadd.f32 %v435, %v629
        %v631 = vpop.f32.mrb[0].mxu0
        %v632 = vadd.f32 %v439, %v631
        %633 = vmatprep.mubr.f32.mxu0 0.0
        %634 = vmatmul.mubr.f32.gmra.mrb[0].mxu0 %v352
        %v635 = vpop.f32.mrb[0].mxu0
        %v636 = vadd.f32 %v435, %v635
        %v637 = vpop.f32.mrb[0].mxu0
        %v638 = vadd.f32 %v439, %v637
        %639 = vmatprep.mubr.f32.mxu0 0.0
        %640 = vmatmul.mubr.f32.gmra.mrb[0].mxu0 %v353
        %v641 = vpop.f32.mrb[0].mxu0
        %v642 = vadd.f32 %v435, %v641
        %v643 = vpop.f32.mrb[0].mxu0
        %v644 = vadd.f32 %v439, %v643
        %645 = vmatprep.mubr.f32.mxu0 0.0
        %646 = vmatmul.mubr.f32.gmra.mrb[0].mxu0 %v354
        %v647 = vpop.f32.mrb[0].mxu0
        %v648 = vadd.f32 %v435, %v647
        %v649 = vpop.f32.mrb[0].mxu0
        %v650 = vadd.f32 %v439, %v649
        %651 = vmatprep.mubr.f32.mxu0 0.0
        %652 = vmatmul.mubr.f32.gmra.mrb[0].mxu0 %v355
        %v653 = vpop.f32.mrb[0].mxu0
        %v654 = vadd.f32 %v435, %v653
        %v655 = vpop.f32.mrb[0].mxu0
        %v656 = vadd.f32 %v439, %v655
        %657 = vmatprep.mubr.f32.mxu0 0.0
        %658 = vmatmul.mubr.f32.gmra.mrb[0].mxu0 %v356
        %v659 = vpop.f32.mrb[0].mxu0
        %v660 = vadd.f32 %v435, %v659
        %v661 = vpop.f32.mrb[0].mxu0
        %v662 = vadd.f32 %v439, %v661
        %663 = vmatprep.mubr.f32.mxu0 0.0
        %664 = vmatmul.mubr.f32.gmra.mrb[0].mxu0 %v357
        %v665 = vpop.f32.mrb[0].mxu0
        %v666 = vadd.f32 %v435, %v665
        %v667 = vpop.f32.mrb[0].mxu0
        %v668 = vadd.f32 %v439, %v667
        %669 = vdwg.mxu0
        %v670 = vmul.f32 %v511, %v511
        %v671 = vmul.f32 %v513, %v513
        %v672 = vmul.f32 %v624, %v624
        %v673 = vmul.f32 %v626, %v626
        %v674 = vmul.f32 %v517, %v517
        %v675 = vmul.f32 %v519, %v519
        %v676 = vmul.f32 %v630, %v630
        %v677 = vmul.f32 %v632, %v632
        %v678 = vmul.f32 %v523, %v523
        %v679 = vmul.f32 %v525, %v525
        %v680 = vmul.f32 %v636, %v636
        %v681 = vmul.f32 %v638, %v638
        %v682 = vmul.f32 %v529, %v529
        %v683 = vmul.f32 %v531, %v531
        %v684 = vmul.f32 %v642, %v642
        %v685 = vmul.f32 %v644, %v644
        %v686 = vmul.f32 %v535, %v535
        %v687 = vmul.f32 %v537, %v537
        %v688 = vmul.f32 %v648, %v648
        %v689 = vmul.f32 %v650, %v650
        %v690 = vmul.f32 %v541, %v541
        %v691 = vmul.f32 %v543, %v543
        %v692 = vmul.f32 %v654, %v654
        %v693 = vmul.f32 %v656, %v656
        %v694 = vmul.f32 %v547, %v547
        %v695 = vmul.f32 %v549, %v549
        %v696 = vmul.f32 %v660, %v660
        %v697 = vmul.f32 %v662, %v662
        %v698 = vmul.f32 %v553, %v553
        %v699 = vmul.f32 %v555, %v555
        %v700 = vmul.f32 %v666, %v666
        %v701 = vmul.f32 %v668, %v668
        %v702 = vmul.f32 %v511, %v670
        %v703 = vmul.f32 %v513, %v671
        %v704 = vmul.f32 %v624, %v672
        %v705 = vmul.f32 %v626, %v673
        %v706 = vmul.f32 %v517, %v674
        %v707 = vmul.f32 %v519, %v675
        %v708 = vmul.f32 %v630, %v676
        %v709 = vmul.f32 %v632, %v677
        %v710 = vmul.f32 %v523, %v678
        %v711 = vmul.f32 %v525, %v679
        %v712 = vmul.f32 %v636, %v680
        %v713 = vmul.f32 %v638, %v681
        %v714 = vmul.f32 %v529, %v682
        %v715 = vmul.f32 %v531, %v683
        %v716 = vmul.f32 %v642, %v684
        %v717 = vmul.f32 %v644, %v685
        %v718 = vmul.f32 %v535, %v686
        %v719 = vmul.f32 %v537, %v687
        %v720 = vmul.f32 %v648, %v688
        %v721 = vmul.f32 %v650, %v689
        %v722 = vmul.f32 %v541, %v690
        %v723 = vmul.f32 %v543, %v691
        %v724 = vmul.f32 %v654, %v692
        %v725 = vmul.f32 %v656, %v693
        %v726 = vmul.f32 %v547, %v694
        %v727 = vmul.f32 %v549, %v695
        %v728 = vmul.f32 %v660, %v696
        %v729 = vmul.f32 %v662, %v697
        %v730 = vmul.f32 %v553, %v698
        %v731 = vmul.f32 %v555, %v699
        %v732 = vmul.f32 %v666, %v700
        %v733 = vmul.f32 %v668, %v701
        %v734 = vmul.f32 %v702, 0.044715
        %v735 = vmul.f32 %v703, 0.044715
        %v736 = vmul.f32 %v704, 0.044715
        %v737 = vmul.f32 %v705, 0.044715
        %v738 = vmul.f32 %v706, 0.044715
        %v739 = vmul.f32 %v707, 0.044715
        %v740 = vmul.f32 %v708, 0.044715
        %v741 = vmul.f32 %v709, 0.044715
        %v742 = vmul.f32 %v710, 0.044715
        %v743 = vmul.f32 %v711, 0.044715
        %v744 = vmul.f32 %v712, 0.044715
        %v745 = vmul.f32 %v713, 0.044715
        %v746 = vmul.f32 %v714, 0.044715
        %v747 = vmul.f32 %v715, 0.044715
        %v748 = vmul.f32 %v716, 0.044715
        %v749 = vmul.f32 %v717, 0.044715
        %v750 = vmul.f32 %v718, 0.044715
        %v751 = vmul.f32 %v719, 0.044715
        %v752 = vmul.f32 %v720, 0.044715
        %v753 = vmul.f32 %v721, 0.044715
        %v754 = vmul.f32 %v722, 0.044715
        %v755 = vmul.f32 %v723, 0.044715
        %v756 = vmul.f32 %v724, 0.044715
        %v757 = vmul.f32 %v725, 0.044715
        %v758 = vmul.f32 %v726, 0.044715
        %v759 = vmul.f32 %v727, 0.044715
        %v760 = vmul.f32 %v728, 0.044715
        %v761 = vmul.f32 %v729, 0.044715
        %v762 = vmul.f32 %v730, 0.044715
        %v763 = vmul.f32 %v731, 0.044715
        %v764 = vmul.f32 %v732, 0.044715
        %v765 = vmul.f32 %v733, 0.044715
        %v766 = vadd.f32 %v511, %v734
        %v767 = vadd.f32 %v513, %v735
        %v768 = vadd.f32 %v624, %v736
        %v769 = vadd.f32 %v626, %v737
        %v770 = vadd.f32 %v517, %v738
        %v771 = vadd.f32 %v519, %v739
        %v772 = vadd.f32 %v630, %v740
        %v773 = vadd.f32 %v632, %v741
        %v774 = vadd.f32 %v523, %v742
        %v775 = vadd.f32 %v525, %v743
        %v776 = vadd.f32 %v636, %v744
        %v777 = vadd.f32 %v638, %v745
        %v778 = vadd.f32 %v529, %v746
        %v779 = vadd.f32 %v531, %v747
        %v780 = vadd.f32 %v642, %v748
        %v781 = vadd.f32 %v644, %v749
        %v782 = vadd.f32 %v535, %v750
        %v783 = vadd.f32 %v537, %v751
        %v784 = vadd.f32 %v648, %v752
        %v785 = vadd.f32 %v650, %v753
        %v786 = vadd.f32 %v541, %v754
        %v787 = vadd.f32 %v543, %v755
        %v788 = vadd.f32 %v654, %v756
        %v789 = vadd.f32 %v656, %v757
        %v790 = vadd.f32 %v547, %v758
        %v791 = vadd.f32 %v549, %v759
        %v792 = vadd.f32 %v660, %v760
        %v793 = vadd.f32 %v662, %v761
        %v794 = vadd.f32 %v553, %v762
        %v795 = vadd.f32 %v555, %v763
        %v796 = vadd.f32 %v666, %v764
        %v797 = vadd.f32 %v668, %v765
        %v798 = vmul.f32 %v766, 0.7978846
        %v799 = vmul.f32 %v767, 0.7978846
        %v800 = vmul.f32 %v768, 0.7978846
        %v801 = vmul.f32 %v769, 0.7978846
        %v802 = vmul.f32 %v770, 0.7978846
        %v803 = vmul.f32 %v771, 0.7978846
        %v804 = vmul.f32 %v772, 0.7978846
        %v805 = vmul.f32 %v773, 0.7978846
        %v806 = vmul.f32 %v774, 0.7978846
        %v807 = vmul.f32 %v775, 0.7978846
        %v808 = vmul.f32 %v776, 0.7978846
        %v809 = vmul.f32 %v777, 0.7978846
        %v810 = vmul.f32 %v778, 0.7978846
        %v811 = vmul.f32 %v779, 0.7978846
        %v812 = vmul.f32 %v780, 0.7978846
        %v813 = vmul.f32 %v781, 0.7978846
        %v814 = vmul.f32 %v782, 0.7978846
        %v815 = vmul.f32 %v783, 0.7978846
        %v816 = vmul.f32 %v784, 0.7978846
        %v817 = vmul.f32 %v785, 0.7978846
        %v818 = vmul.f32 %v786, 0.7978846
        %v819 = vmul.f32 %v787, 0.7978846
        %v820 = vmul.f32 %v788, 0.7978846
        %v821 = vmul.f32 %v789, 0.7978846
        %v822 = vmul.f32 %v790, 0.7978846
        %v823 = vmul.f32 %v791, 0.7978846
        %v824 = vmul.f32 %v792, 0.7978846
        %v825 = vmul.f32 %v793, 0.7978846
        %v826 = vmul.f32 %v794, 0.7978846
        %v827 = vmul.f32 %v795, 0.7978846
        %v828 = vmul.f32 %v796, 0.7978846
        %v829 = vmul.f32 %v797, 0.7978846
        %v830 = vtanh.pop %v798
        %v831 = vtanh.pop %v799
        %v832 = vtanh.pop %v800
        %v833 = vtanh.pop %v801
        %v834 = vtanh.pop %v802
        %v835 = vtanh.pop %v803
        %v836 = vtanh.pop %v804
        %v837 = vtanh.pop %v805
        %v838 = vtanh.pop %v806
        %v839 = vtanh.pop %v807
        %v840 = vtanh.pop %v808
        %v841 = vtanh.pop %v809
        %v842 = vtanh.pop %v810
        %v843 = vtanh.pop %v811
        %v844 = vtanh.pop %v812
        %v845 = vtanh.pop %v813
        %v846 = vtanh.pop %v814
        %v847 = vtanh.pop %v815
        %v848 = vtanh.pop %v816
        %v849 = vtanh.pop %v817
        %v850 = vtanh.pop %v818
        %v851 = vtanh.pop %v819
        %v852 = vtanh.pop %v820
        %v853 = vtanh.pop %v821
        %v854 = vtanh.pop %v822
        %v855 = vtanh.pop %v823
        %v856 = vtanh.pop %v824
        %v857 = vtanh.pop %v825
        %v858 = vtanh.pop %v826
        %v859 = vtanh.pop %v827
        %v860 = vtanh.pop %v828
        %v861 = vtanh.pop %v829
        %v862 = vadd.f32 %v830, 1.0
        %v863 = vadd.f32 %v831, 1.0
        %v864 = vadd.f32 %v832, 1.0
        %v865 = vadd.f32 %v833, 1.0
        %v866 = vadd.f32 %v834, 1.0
        %v867 = vadd.f32 %v835, 1.0
        %v868 = vadd.f32 %v836, 1.0
        %v869 = vadd.f32 %v837, 1.0
        %v870 = vadd.f32 %v838, 1.0
        %v871 = vadd.f32 %v839, 1.0
        %v872 = vadd.f32 %v840, 1.0
        %v873 = vadd.f32 %v841, 1.0
        %v874 = vadd.f32 %v842, 1.0
        %v875 = vadd.f32 %v843, 1.0
        %v876 = vadd.f32 %v844, 1.0
        %v877 = vadd.f32 %v845, 1.0
        %v878 = vadd.f32 %v846, 1.0
        %v879 = vadd.f32 %v847, 1.0
        %v880 = vadd.f32 %v848, 1.0
        %v881 = vadd.f32 %v849, 1.0
        %v882 = vadd.f32 %v850, 1.0
        %v883 = vadd.f32 %v851, 1.0
        %v884 = vadd.f32 %v852, 1.0
        %v885 = vadd.f32 %v853, 1.0
        %v886 = vadd.f32 %v854, 1.0
        %v887 = vadd.f32 %v855, 1.0
        %v888 = vadd.f32 %v856, 1.0
        %v889 = vadd.f32 %v857, 1.0
        %v890 = vadd.f32 %v858, 1.0
        %v891 = vadd.f32 %v859, 1.0
        %v892 = vadd.f32 %v860, 1.0
        %v893 = vadd.f32 %v861, 1.0
        %v894 = vmul.f32 %v862, 0.5
        %v895 = vmul.f32 %v863, 0.5
        %v896 = vmul.f32 %v864, 0.5
        %v897 = vmul.f32 %v865, 0.5
        %v898 = vmul.f32 %v866, 0.5
        %v899 = vmul.f32 %v867, 0.5
        %v900 = vmul.f32 %v868, 0.5
        %v901 = vmul.f32 %v869, 0.5
        %v902 = vmul.f32 %v870, 0.5
        %v903 = vmul.f32 %v871, 0.5
        %v904 = vmul.f32 %v872, 0.5
        %v905 = vmul.f32 %v873, 0.5
        %v906 = vmul.f32 %v874, 0.5
        %v907 = vmul.f32 %v875, 0.5
        %v908 = vmul.f32 %v876, 0.5
        %v909 = vmul.f32 %v877, 0.5
        %v910 = vmul.f32 %v878, 0.5
        %v911 = vmul.f32 %v879, 0.5
        %v912 = vmul.f32 %v880, 0.5
        %v913 = vmul.f32 %v881, 0.5
        %v914 = vmul.f32 %v882, 0.5
        %v915 = vmul.f32 %v883, 0.5
        %v916 = vmul.f32 %v884, 0.5
        %v917 = vmul.f32 %v885, 0.5
        %v918 = vmul.f32 %v886, 0.5
        %v919 = vmul.f32 %v887, 0.5
        %v920 = vmul.f32 %v888, 0.5
        %v921 = vmul.f32 %v889, 0.5
        %v922 = vmul.f32 %v890, 0.5
        %v923 = vmul.f32 %v891, 0.5
        %v924 = vmul.f32 %v892, 0.5
        %v925 = vmul.f32 %v893, 0.5
        %v926 = vmul.f32 %v511, %v894
        %v927 = vmul.f32 %v513, %v895
        %v928 = vmul.f32 %v624, %v896
        %v929 = vmul.f32 %v626, %v897
        %v930 = vmul.f32 %v517, %v898
        %v931 = vmul.f32 %v519, %v899
        %v932 = vmul.f32 %v630, %v900
        %v933 = vmul.f32 %v632, %v901
        %v934 = vmul.f32 %v523, %v902
        %v935 = vmul.f32 %v525, %v903
        %v936 = vmul.f32 %v636, %v904
        %v937 = vmul.f32 %v638, %v905
        %v938 = vmul.f32 %v529, %v906
        %v939 = vmul.f32 %v531, %v907
        %v940 = vmul.f32 %v642, %v908
        %v941 = vmul.f32 %v644, %v909
        %v942 = vmul.f32 %v535, %v910
        %v943 = vmul.f32 %v537, %v911
        %v944 = vmul.f32 %v648, %v912
        %v945 = vmul.f32 %v650, %v913
        %v946 = vmul.f32 %v541, %v914
        %v947 = vmul.f32 %v543, %v915
        %v948 = vmul.f32 %v654, %v916
        %v949 = vmul.f32 %v656, %v917
        %v950 = vmul.f32 %v547, %v918
        %v951 = vmul.f32 %v549, %v919
        %v952 = vmul.f32 %v660, %v920
        %v953 = vmul.f32 %v662, %v921
        %v954 = vmul.f32 %v553, %v922
        %v955 = vmul.f32 %v555, %v923
        %v956 = vmul.f32 %v666, %v924
        %v957 = vmul.f32 %v668, %v925
        %v958 = vld [vmem:[#allocation2] sm:$0xff]
        %v959 = vld [vmem:[#allocation2 + $0x8] sm:$0xff]
        %v960 = vld [vmem:[#allocation2 + $0x10] sm:$0xff]
        %v961 = vld [vmem:[#allocation2 + $0x18] sm:$0xff]
        %v962 = vld [vmem:[#allocation2 + $0x20] sm:$0xff]
        %v963 = vld [vmem:[#allocation2 + $0x28] sm:$0xff]
        %v964 = vld [vmem:[#allocation2 + $0x30] sm:$0xff]
        %v965 = vld [vmem:[#allocation2 + $0x38] sm:$0xff]
        %v966 = vld [vmem:[#allocation9] sm:$0xff]
        %v967 = vld [vmem:[#allocation9 + $0x8] sm:$0xff]
        %v968 = vld [vmem:[#allocation9 + $0x10] sm:$0xff]
        %v969 = vld [vmem:[#allocation9 + $0x18] sm:$0xff]
        %v970 = vld [vmem:[#allocation9 + $0x20] sm:$0xff]
        %v971 = vld [vmem:[#allocation9 + $0x28] sm:$0xff]
        %v972 = vld [vmem:[#allocation9 + $0x30] sm:$0xff]
        %v973 = vld [vmem:[#allocation9 + $0x38] sm:$0xff]
        %v974 = vld [vmem:[#allocation9 + $0x40] sm:$0xff]
        %v975 = vld [vmem:[#allocation9 + $0x48] sm:$0xff]
        %v976 = vld [vmem:[#allocation9 + $0x50] sm:$0xff]
        %v977 = vld [vmem:[#allocation9 + $0x58] sm:$0xff]
        %v978 = vld [vmem:[#allocation9 + $0x60] sm:$0xff]
        %v979 = vld [vmem:[#allocation9 + $0x68] sm:$0xff]
        %v980 = vld [vmem:[#allocation9 + $0x70] sm:$0xff]
        %v981 = vld [vmem:[#allocation9 + $0x78] sm:$0xff]
        %v982 = vld [vmem:[#allocation9 + $0x80] sm:$0xff]
        %v983 = vld [vmem:[#allocation9 + $0x88] sm:$0xff]
        %v984 = vld [vmem:[#allocation9 + $0x90] sm:$0xff]
        %v985 = vld [vmem:[#allocation9 + $0x98] sm:$0xff]
        %v986 = vld [vmem:[#allocation9 + $0xa0] sm:$0xff]
        %v987 = vld [vmem:[#allocation9 + $0xa8] sm:$0xff]
        %v988 = vld [vmem:[#allocation9 + $0xb0] sm:$0xff]
        %v989 = vld [vmem:[#allocation9 + $0xb8] sm:$0xff]
        %v990 = vld [vmem:[#allocation9 + $0xc0] sm:$0xff]
        %v991 = vld [vmem:[#allocation9 + $0xc8] sm:$0xff]
        %v992 = vld [vmem:[#allocation9 + $0xd0] sm:$0xff]
        %v993 = vld [vmem:[#allocation9 + $0xd8] sm:$0xff]
        %v994 = vld [vmem:[#allocation9 + $0xe0] sm:$0xff]
        %v995 = vld [vmem:[#allocation9 + $0xe8] sm:$0xff]
        %v996 = vld [vmem:[#allocation9 + $0xf0] sm:$0xff]
        %v997 = vld [vmem:[#allocation9 + $0xf8] sm:$0xff]
        %v998 = vld [vmem:[#allocation9 + $0x100] sm:$0xff]
        %v999 = vld [vmem:[#allocation9 + $0x108] sm:$0xff]
        %v1000 = vld [vmem:[#allocation9 + $0x110] sm:$0xff]
        %v1001 = vld [vmem:[#allocation9 + $0x118] sm:$0xff]
        %v1002 = vld [vmem:[#allocation9 + $0x120] sm:$0xff]
        %v1003 = vld [vmem:[#allocation9 + $0x128] sm:$0xff]
        %v1004 = vld [vmem:[#allocation9 + $0x130] sm:$0xff]
        %v1005 = vld [vmem:[#allocation9 + $0x138] sm:$0xff]
        %v1006 = vld [vmem:[#allocation9 + $0x140] sm:$0xff]
        %v1007 = vld [vmem:[#allocation9 + $0x148] sm:$0xff]
        %v1008 = vld [vmem:[#allocation9 + $0x150] sm:$0xff]
        %v1009 = vld [vmem:[#allocation9 + $0x158] sm:$0xff]
        %v1010 = vld [vmem:[#allocation9 + $0x160] sm:$0xff]
        %v1011 = vld [vmem:[#allocation9 + $0x168] sm:$0xff]
        %v1012 = vld [vmem:[#allocation9 + $0x170] sm:$0xff]
        %v1013 = vld [vmem:[#allocation9 + $0x178] sm:$0xff]
        %v1014 = vld [vmem:[#allocation9 + $0x180] sm:$0xff]
        %v1015 = vld [vmem:[#allocation9 + $0x188] sm:$0xff]
        %v1016 = vld [vmem:[#allocation9 + $0x190] sm:$0xff]
        %v1017 = vld [vmem:[#allocation9 + $0x198] sm:$0xff]
        %v1018 = vld [vmem:[#allocation9 + $0x1a0] sm:$0xff]
        %v1019 = vld [vmem:[#allocation9 + $0x1a8] sm:$0xff]
        %v1020 = vld [vmem:[#allocation9 + $0x1b0] sm:$0xff]
        %v1021 = vld [vmem:[#allocation9 + $0x1b8] sm:$0xff]
        %v1022 = vld [vmem:[#allocation9 + $0x1c0] sm:$0xff]
        %v1023 = vld [vmem:[#allocation9 + $0x1c8] sm:$0xff]
        %v1024 = vld [vmem:[#allocation9 + $0x1d0] sm:$0xff]
        %v1025 = vld [vmem:[#allocation9 + $0x1d8] sm:$0xff]
        %v1026 = vld [vmem:[#allocation9 + $0x1e0] sm:$0xff]
        %v1027 = vld [vmem:[#allocation9 + $0x1e8] sm:$0xff]
        %v1028 = vld [vmem:[#allocation9 + $0x1f0] sm:$0xff]
        %v1029 = vld [vmem:[#allocation9 + $0x1f8] sm:$0xff]
        %1030 = vmatprep.subr.mxu0 0.0
        %1031 = vmatpush1.msra.mxu0 %v966
        %1032 = vmatprep.subr.mxu0 0.0
        %1033 = vmatpush1.msra.mxu0 %v967
        %1034 = vmatprep.subr.mxu0 0.0
        %1035 = vmatpush1.msra.mxu0 %v968
        %1036 = vmatprep.subr.mxu0 0.0
        %1037 = vmatpush1.msra.mxu0 %v969
        %1038 = vmatprep.subr.mxu0 0.0
        %1039 = vmatpush1.msra.mxu0 %v970
        %1040 = vmatprep.subr.mxu0 0.0
        %1041 = vmatpush1.msra.mxu0 %v971
        %1042 = vmatprep.subr.mxu0 0.0
        %1043 = vmatpush1.msra.mxu0 %v972
        %1044 = vmatprep.subr.mxu0 0.0
        %1045 = vmatpush1.msra.mxu0 %v973
        %1046 = vmatprep.subr.mxu0 0.0
        %1047 = vmatpush1.msra.mxu0 %v974
        %1048 = vmatprep.subr.mxu0 0.0
        %1049 = vmatpush1.msra.mxu0 %v975
        %1050 = vmatprep.subr.mxu0 0.0
        %1051 = vmatpush1.msra.mxu0 %v976
        %1052 = vmatprep.subr.mxu0 0.0
        %1053 = vmatpush1.msra.mxu0 %v977
        %1054 = vmatprep.subr.mxu0 0.0
        %1055 = vmatpush1.msra.mxu0 %v978
        %1056 = vmatprep.subr.mxu0 0.0
        %1057 = vmatpush1.msra.mxu0 %v979
        %1058 = vmatprep.subr.mxu0 0.0
        %1059 = vmatpush1.msra.mxu0 %v980
        %1060 = vmatprep.subr.mxu0 0.0
        %1061 = vmatpush1.msra.mxu0 %v981
        %1062 = vmatprep.subr.mxu0 0.0
        %1063 = vmatpush1.msra.mxu0 %v982
        %1064 = vmatprep.subr.mxu0 0.0
        %1065 = vmatpush1.msra.mxu0 %v983
        %1066 = vmatprep.subr.mxu0 0.0
        %1067 = vmatpush1.msra.mxu0 %v984
        %1068 = vmatprep.subr.mxu0 0.0
        %1069 = vmatpush1.msra.mxu0 %v985
        %1070 = vmatprep.subr.mxu0 0.0
        %1071 = vmatpush1.msra.mxu0 %v986
        %1072 = vmatprep.subr.mxu0 0.0
        %1073 = vmatpush1.msra.mxu0 %v987
        %1074 = vmatprep.subr.mxu0 0.0
        %1075 = vmatpush1.msra.mxu0 %v988
        %1076 = vmatprep.subr.mxu0 0.0
        %1077 = vmatpush1.msra.mxu0 %v989
        %1078 = vmatprep.subr.mxu0 0.0
        %1079 = vmatpush1.msra.mxu0 %v990
        %1080 = vmatprep.subr.mxu0 0.0
        %1081 = vmatpush1.msra.mxu0 %v991
        %1082 = vmatprep.subr.mxu0 0.0
        %1083 = vmatpush1.msra.mxu0 %v992
        %1084 = vmatprep.subr.mxu0 0.0
        %1085 = vmatpush1.msra.mxu0 %v993
        %1086 = vmatprep.subr.mxu0 0.0
        %1087 = vmatpush1.msra.mxu0 %v994
        %1088 = vmatprep.subr.mxu0 0.0
        %1089 = vmatpush1.msra.mxu0 %v995
        %1090 = vmatprep.subr.mxu0 0.0
        %1091 = vmatpush1.msra.mxu0 %v996
        %1092 = vmatprep.subr.mxu0 0.0
        %1093 = vmatpush1.msra.mxu0 %v997
        %1094 = vmatprep.mubr.f32.mxu0 %v927
        %1095 = vmatmul.mubr.f32.gmra.mrb[0].mxu0 %v926
        %v1096 = vpop.f32.mrb[0].mxu0
        %v1097 = vadd.f32 0.0, %v1096
        %v1098 = vpop.f32.mrb[0].mxu0
        %1099 = vmatprep.mubr.f32.mxu0 %v931
        %1100 = vmatmul.mubr.f32.gmra.mrb[0].mxu0 %v930
        %v1101 = vpop.f32.mrb[0].mxu0
        %v1102 = vadd.f32 0.0, %v1101
        %v1103 = vpop.f32.mrb[0].mxu0
        %1104 = vmatprep.mubr.f32.mxu0 %v935
        %1105 = vmatmul.mubr.f32.gmra.mrb[0].mxu0 %v934
        %v1106 = vpop.f32.mrb[0].mxu0
        %v1107 = vadd.f32 0.0, %v1106
        %v1108 = vpop.f32.mrb[0].mxu0
        %1109 = vmatprep.mubr.f32.mxu0 %v939
        %1110 = vmatmul.mubr.f32.gmra.mrb[0].mxu0 %v938
        %v1111 = vpop.f32.mrb[0].mxu0
        %v1112 = vadd.f32 0.0, %v1111
        %v1113 = vpop.f32.mrb[0].mxu0
        %1114 = vmatprep.mubr.f32.mxu0 %v943
        %1115 = vmatmul.mubr.f32.gmra.mrb[0].mxu0 %v942
        %v1116 = vpop.f32.mrb[0].mxu0
        %v1117 = vadd.f32 0.0, %v1116
        %v1118 = vpop.f32.mrb[0].mxu0
        %1119 = vmatprep.mubr.f32.mxu0 %v947
        %1120 = vmatmul.mubr.f32.gmra.mrb[0].mxu0 %v946
        %v1121 = vpop.f32.mrb[0].mxu0
        %v1122 = vadd.f32 0.0, %v1121
        %v1123 = vpop.f32.mrb[0].mxu0
        %1124 = vmatprep.mubr.f32.mxu0 %v951
        %1125 = vmatmul.mubr.f32.gmra.mrb[0].mxu0 %v950
        %v1126 = vpop.f32.mrb[0].mxu0
        %v1127 = vadd.f32 0.0, %v1126
        %v1128 = vpop.f32.mrb[0].mxu0
        %1129 = vmatprep.mubr.f32.mxu0 %v955
        %1130 = vmatmul.mubr.f32.gmra.mrb[0].mxu0 %v954
        %v1131 = vpop.f32.mrb[0].mxu0
        %v1132 = vadd.f32 0.0, %v1131
        %v1133 = vpop.f32.mrb[0].mxu0
        %1134 = vdwg.mxu0
        %1135 = vmatprep.subr.mxu0 0.0
        %1136 = vmatpush1.msra.mxu0 %v998
        %1137 = vmatprep.subr.mxu0 0.0
        %1138 = vmatpush1.msra.mxu0 %v999
        %1139 = vmatprep.subr.mxu0 0.0
        %1140 = vmatpush1.msra.mxu0 %v1000
        %1141 = vmatprep.subr.mxu0 0.0
        %1142 = vmatpush1.msra.mxu0 %v1001
        %1143 = vmatprep.subr.mxu0 0.0
        %1144 = vmatpush1.msra.mxu0 %v1002
        %1145 = vmatprep.subr.mxu0 0.0
        %1146 = vmatpush1.msra.mxu0 %v1003
        %1147 = vmatprep.subr.mxu0 0.0
        %1148 = vmatpush1.msra.mxu0 %v1004
        %1149 = vmatprep.subr.mxu0 0.0
        %1150 = vmatpush1.msra.mxu0 %v1005
        %1151 = vmatprep.subr.mxu0 0.0
        %1152 = vmatpush1.msra.mxu0 %v1006
        %1153 = vmatprep.subr.mxu0 0.0
        %1154 = vmatpush1.msra.mxu0 %v1007
        %1155 = vmatprep.subr.mxu0 0.0
        %1156 = vmatpush1.msra.mxu0 %v1008
        %1157 = vmatprep.subr.mxu0 0.0
        %1158 = vmatpush1.msra.mxu0 %v1009
        %1159 = vmatprep.subr.mxu0 0.0
        %1160 = vmatpush1.msra.mxu0 %v1010
        %1161 = vmatprep.subr.mxu0 0.0
        %1162 = vmatpush1.msra.mxu0 %v1011
        %1163 = vmatprep.subr.mxu0 0.0
        %1164 = vmatpush1.msra.mxu0 %v1012
        %1165 = vmatprep.subr.mxu0 0.0
        %1166 = vmatpush1.msra.mxu0 %v1013
        %1167 = vmatprep.subr.mxu0 0.0
        %1168 = vmatpush1.msra.mxu0 %v1014
        %1169 = vmatprep.subr.mxu0 0.0
        %1170 = vmatpush1.msra.mxu0 %v1015
        %1171 = vmatprep.subr.mxu0 0.0
        %1172 = vmatpush1.msra.mxu0 %v1016
        %1173 = vmatprep.subr.mxu0 0.0
        %1174 = vmatpush1.msra.mxu0 %v1017
        %1175 = vmatprep.subr.mxu0 0.0
        %1176 = vmatpush1.msra.mxu0 %v1018
        %1177 = vmatprep.subr.mxu0 0.0
        %1178 = vmatpush1.msra.mxu0 %v1019
        %1179 = vmatprep.subr.mxu0 0.0
        %1180 = vmatpush1.msra.mxu0 %v1020
        %1181 = vmatprep.subr.mxu0 0.0
        %1182 = vmatpush1.msra.mxu0 %v1021
        %1183 = vmatprep.subr.mxu0 0.0
        %1184 = vmatpush1.msra.mxu0 %v1022
        %1185 = vmatprep.subr.mxu0 0.0
        %1186 = vmatpush1.msra.mxu0 %v1023
        %1187 = vmatprep.subr.mxu0 0.0
        %1188 = vmatpush1.msra.mxu0 %v1024
        %1189 = vmatprep.subr.mxu0 0.0
        %1190 = vmatpush1.msra.mxu0 %v1025
        %1191 = vmatprep.subr.mxu0 0.0
        %1192 = vmatpush1.msra.mxu0 %v1026
        %1193 = vmatprep.subr.mxu0 0.0
        %1194 = vmatpush1.msra.mxu0 %v1027
        %1195 = vmatprep.subr.mxu0 0.0
        %1196 = vmatpush1.msra.mxu0 %v1028
        %1197 = vmatprep.subr.mxu0 0.0
        %1198 = vmatpush1.msra.mxu0 %v1029
        %1199 = vmatprep.mubr.f32.mxu0 %v929
        %1200 = vmatmul.mubr.f32.gmra.mrb[0].mxu0 %v928
        %v1201 = vpop.f32.mrb[0].mxu0
        %v1202 = vadd.f32 %v1097, %v1201
        %v1203 = vpop.f32.mrb[0].mxu0
        %1204 = vmatprep.mubr.f32.mxu0 %v933
        %1205 = vmatmul.mubr.f32.gmra.mrb[0].mxu0 %v932
        %v1206 = vpop.f32.mrb[0].mxu0
        %v1207 = vadd.f32 %v1102, %v1206
        %v1208 = vpop.f32.mrb[0].mxu0
        %1209 = vmatprep.mubr.f32.mxu0 %v937
        %1210 = vmatmul.mubr.f32.gmra.mrb[0].mxu0 %v936
        %v1211 = vpop.f32.mrb[0].mxu0
        %v1212 = vadd.f32 %v1107, %v1211
        %v1213 = vpop.f32.mrb[0].mxu0
        %1214 = vmatprep.mubr.f32.mxu0 %v941
        %1215 = vmatmul.mubr.f32.gmra.mrb[0].mxu0 %v940
        %v1216 = vpop.f32.mrb[0].mxu0
        %v1217 = vadd.f32 %v1112, %v1216
        %v1218 = vpop.f32.mrb[0].mxu0
        %1219 = vmatprep.mubr.f32.mxu0 %v945
        %1220 = vmatmul.mubr.f32.gmra.mrb[0].mxu0 %v944
        %v1221 = vpop.f32.mrb[0].mxu0
        %v1222 = vadd.f32 %v1117, %v1221
        %v1223 = vpop.f32.mrb[0].mxu0
        %1224 = vmatprep.mubr.f32.mxu0 %v949
        %1225 = vmatmul.mubr.f32.gmra.mrb[0].mxu0 %v948
        %v1226 = vpop.f32.mrb[0].mxu0
        %v1227 = vadd.f32 %v1122, %v1226
        %v1228 = vpop.f32.mrb[0].mxu0
        %1229 = vmatprep.mubr.f32.mxu0 %v953
        %1230 = vmatmul.mubr.f32.gmra.mrb[0].mxu0 %v952
        %v1231 = vpop.f32.mrb[0].mxu0
        %v1232 = vadd.f32 %v1127, %v1231
        %v1233 = vpop.f32.mrb[0].mxu0
        %1234 = vmatprep.mubr.f32.mxu0 %v957
        %1235 = vmatmul.mubr.f32.gmra.mrb[0].mxu0 %v956
        %v1236 = vpop.f32.mrb[0].mxu0
        %v1237 = vadd.f32 %v1132, %v1236
        %v1238 = vpop.f32.mrb[0].mxu0
        %1239 = vdwg.mxu0
        %v1240 = vadd.f32 %v958, %v1202
        %v1241 = vadd.f32 %v959, %v1207
        %v1242 = vadd.f32 %v960, %v1212
        %v1243 = vadd.f32 %v961, %v1217
        %v1244 = vadd.f32 %v962, %v1222
        %v1245 = vadd.f32 %v963, %v1227
        %v1246 = vadd.f32 %v964, %v1232
        %v1247 = vadd.f32 %v965, %v1237
        %1248 = vst [vmem:[#allocation2] sm:$0xff] %v1240
        %1249 = vst [vmem:[#allocation2 + $0x8] sm:$0xff] %v1241
        %1250 = vst [vmem:[#allocation2 + $0x10] sm:$0xff] %v1242
        %1251 = vst [vmem:[#allocation2 + $0x18] sm:$0xff] %v1243
        %1252 = vst [vmem:[#allocation2 + $0x20] sm:$0xff] %v1244
        %1253 = vst [vmem:[#allocation2 + $0x28] sm:$0xff] %v1245
        %1254 = vst [vmem:[#allocation2 + $0x30] sm:$0xff] %v1246
        %1255 = vst [vmem:[#allocation2 + $0x38] sm:$0xff] %v1247
        // Predicated region
        $region65: #{tpu_custom_call.1} parent=39 // pred_check
          %p1256 = pneg %p338
        $region66: #{tpu_custom_call.1} parent=39 // pred_check_branch
          %1258 = sbr.rel (%p1256) target = $region68
        $region67: #{tpu_custom_call.1} parent=39 // pred_region
          %v1259 = vld [vmem:[#allocation2] sm:$0xff]
          %v1260 = vld [vmem:[#allocation2 + $0x8] sm:$0xff]
          %v1261 = vld [vmem:[#allocation2 + $0x10] sm:$0xff]
          %v1262 = vld [vmem:[#allocation2 + $0x18] sm:$0xff]
          %v1263 = vld [vmem:[#allocation2 + $0x20] sm:$0xff]
          %v1264 = vld [vmem:[#allocation2 + $0x28] sm:$0xff]
          %v1265 = vld [vmem:[#allocation2 + $0x30] sm:$0xff]
          %v1266 = vld [vmem:[#allocation2 + $0x38] sm:$0xff]
          %v1267 = vld [vmem:[#allocation11] sm:$0x1]
          %v1269 = vlaneseq
          %v1270 = vshrl.u32 %v1269, 7
          %v1271 = vsub.s32 0, %v1270
          %v1272 = vrot.slane %v1267, %v1271
          %v1274 = vadd.f32 %v1259, %v1272
          %v1275 = vadd.f32 %v1260, %v1272
          %v1276 = vadd.f32 %v1261, %v1272
          %v1277 = vadd.f32 %v1262, %v1272
          %v1278 = vadd.f32 %v1263, %v1272
          %v1279 = vadd.f32 %v1264, %v1272
          %v1280 = vadd.f32 %v1265, %v1272
          %v1281 = vadd.f32 %v1266, %v1272
          %1282 = vst [vmem:[%s332] sm:$0xff] %v1274
          %1283 = vst [vmem:[%s332 + $0x8] sm:$0xff] %v1275
          %1284 = vst [vmem:[%s332 + $0x10] sm:$0xff] %v1276
          %1285 = vst [vmem:[%s332 + $0x18] sm:$0xff] %v1277
          %1286 = vst [vmem:[%s332 + $0x20] sm:$0xff] %v1278
          %1287 = vst [vmem:[%s332 + $0x28] sm:$0xff] %v1279
          %1288 = vst [vmem:[%s332 + $0x30] sm:$0xff] %v1280
          %1289 = vst [vmem:[%s332 + $0x38] sm:$0xff] %v1281
        $region68: #{tpu_custom_call.1} parent=39 // pred_fallthru
          _
        %s1290 = sand.u32 %s169, 1
        %s1291 = scalar_lea.sflag [#allocation5], %s1290
        %s1292 = sand.u32 %s169, 1
        %s1293 = smul.addr %s1292, 64
        %s1294 = scalar_lea.vmem [#allocation12], %s1293
        // Predicated region
        $region69: #{tpu_custom_call.1} parent=39 // pred_check
          %p1295 = pneg %p179
        $region70: #{tpu_custom_call.1} parent=39 // pred_check_branch
          %1297 = sbr.rel (%p1295) target = $region72
        $region71: #{tpu_custom_call.1} parent=39 // pred_region
          %s1298 = smul.u32 8, %s28
          %s1300 = ssub.s32 1024, 1024
          %1301 = vsyncadd %s1291, %s1300
          %s1302 = smul.addr %s1298, 128
          %s1303 = scalar_lea.hbm %s5, %s1302
          %s1304 = sshll.u32 %s1294, 4
          %s1305 = int_to_ptr.vmem [resolvable:$true] %s1304
          %1310 = dma.vmem_to_hbm [thread:$0]  %s1305, 1024, %s1303, %s1291, 128, 128, 8
        $region72: #{tpu_custom_call.1} parent=39 // pred_fallthru
          _
      $region40: #{tpu_custom_call.1} parent=5 // pred_fallthru
        _
      %p1311 = scmp.le.s32.totalorder 2, %s19
      // Predicated region
      $region73: #{tpu_custom_call.1} parent=5 // pred_check
        %p1312 = pneg %p1311
      $region74: #{tpu_custom_call.1} parent=5 // pred_check_branch
        %1314 = sbr.rel (%p1312) target = $region76
      $region75: #{tpu_custom_call.1} parent=5 // pred_region
        %s1315 = ssub.s32 %s19, 2
        // Predicated region
        $region77: #{tpu_custom_call.1} parent=75 // pred_check
          %p1316 = pneg %p185
        $region78: #{tpu_custom_call.1} parent=75 // pred_check_branch
          %1318 = sbr.rel (%p1316) target = $region80
        $region79: #{tpu_custom_call.1} parent=75 // pred_region
          %s1319 = sand.u32 %s170, 1
          %s1320 = scalar_lea.sflag [#allocation5], %s1319
          %s1321 = sand.u32 %s170, 1
          %s1322 = smul.addr %s1321, 64
          %s1323 = scalar_lea.vmem [#allocation12], %s1322
          %1324 = dma.done %s1320, 1024
        $region80: #{tpu_custom_call.1} parent=75 // pred_fallthru
          _
      $region76: #{tpu_custom_call.1} parent=5 // pred_fallthru
        _
    $region6: #{tpu_custom_call.1} parent=1 // loop_footer
      %s23 = sadd.s32 1, %s19
    $region7: #{tpu_custom_call.1} parent=1 // loop_footer_branch
      %18 = sbr.rel target = $region3
    $region8: #{tpu_custom_call.1} parent=1 // loop_exit
      _
    %1325 = vsyncpa [#allocation4], 1
    %s1326 = scalar_lea.sflag [#allocation4], 1
    %1327 = vsyncpa %s1326, 1
    %1328 = vsyncpa [#allocation7], 1
    %1329 = vsyncpa [#allocation10], 1
    %1330 = vsyncpa [#allocation5], 1
    %s1331 = scalar_lea.sflag [#allocation5], 1
    %1332 = vsyncpa %s1331, 1

</llo_original>
